<compile_context>
chip_gen: v6e
topology: v6e:2x2x1
jax: 0.10.0
libtpu: 0.0.40
codegen_flags: <defaults>
</compile_context>

<pallas_src>
import jax
import jax.numpy as jnp
import numpy as np
from jax.experimental import pallas as pl
from jax.experimental.pallas import tpu as pltpu

_MIB = 1024 * 1024


# ----------------------------------------------------------------------------
# Kernels
# ----------------------------------------------------------------------------
def _protonet_kernel(mult_ref, labels_ref, q_ref, s_ref, o_ref):
    """ProtoNetHead: -(||q||^2 - 2 q.P + ||P||^2) * mult, P = class-mean prototypes."""
    s = s_ref[...]                                    # (tb, ns, d)  native dtype (bf16 stays bf16)
    labels = labels_ref[...]                          # (tb, ns, 1)  int32
    n_way = o_ref.shape[2]
    kpad = ((n_way + 127) // 128) * 128               # lane-dense class dim for intermediates only

    class_ids = jax.lax.broadcasted_iota(jnp.int32, (1, 1, kpad), 2)
    one = jnp.ones((), dtype=s.dtype)
    zero = jnp.zeros((), dtype=s.dtype)
    onehot = jnp.where(labels == class_ids, one, zero)               # (tb, ns, kpad) native dtype

    # Per-class support sums, oriented (d, kpad) so the second dot needs no rhs transpose.
    m_sum = jax.lax.dot_general(s, onehot, (((1,), (1,)), ((0,), (0,))),
                                preferred_element_type=jnp.float32)  # (tb, d, kpad) f32
    counts = jnp.sum(onehot.astype(jnp.float32), axis=1, keepdims=True)   # (tb, 1, kpad)
    # Clamp so empty / padded classes give finite junk (PyTorch would NaN/Inf there);
    # exact reciprocal on purpose (approx=True would break the 1e-4 tolerance).
    inv_c = pl.reciprocal(jnp.maximum(counts, 1.0))

    q32 = q_ref[...].astype(jnp.float32)                             # (tb, nq, d)
    qm = jax.lax.dot_general(q32, m_sum, (((2,), (1,)), ((0,), (0,))),
                             preferred_element_type=jnp.float32)     # (tb, nq, kpad) canonical NN
    aa = jnp.sum(q32 * q32, axis=2, keepdims=True)                   # (tb, nq, 1)
    mm = jnp.sum(m_sum * m_sum, axis=1, keepdims=True)               # (tb, 1, kpad)

    # P = m_sum / counts folded in via inv_c; mult = scale * (1/d if normalize else 1).
    mult = mult_ref[0]
    logits = -(aa - 2.0 * (qm * inv_c) + mm * (inv_c * inv_c)) * mult
    o_ref[...] = logits[:, :, :n_way]                                # only live lanes hit HBM


def _cosine_kernel(mult_ref, labels_ref, q_ref, s_ref, o_ref):
    """CosineClassfier: scale * cosine(query, class-mean prototypes)."""
    s = s_ref[...]                                    # (tb, ns, d)  native dtype
    labels = labels_ref[...]                          # (tb, ns, 1)  int32
    n_way = o_ref.shape[2]
    kpad = ((n_way + 127) // 128) * 128

    class_ids = jax.lax.broadcasted_iota(jnp.int32, (1, 1, kpad), 2)
    one = jnp.ones((), dtype=s.dtype)
    zero = jnp.zeros((), dtype=s.dtype)
    onehot = jnp.where(labels == class_ids, one, zero)               # (tb, ns, kpad)

    m_sum = jax.lax.dot_general(s, onehot, (((1,), (1,)), ((0,), (0,))),
                                preferred_element_type=jnp.float32)  # (tb, d, kpad) f32

    # normalize(m_sum / counts) == normalize(m_sum): the counts cancel, never needed.
    q32 = q_ref[...].astype(jnp.float32)
    eps2 = jnp.float32(1e-24)                                        # == (1e-12)^2
    inv_qn = jax.lax.rsqrt(jnp.maximum(jnp.sum(q32 * q32, axis=2, keepdims=True), eps2))   # (tb,nq,1)
    inv_mn = jax.lax.rsqrt(jnp.maximum(jnp.sum(m_sum * m_sum, axis=1, keepdims=True), eps2))  # (tb,1,kpad)

    qm = jax.lax.dot_general(q32, m_sum, (((2,), (1,)), ((0,), (0,))),
                             preferred_element_type=jnp.float32)     # (tb, nq, kpad)
    logits = qm * (inv_qn * mult_ref[0]) * inv_mn
    o_ref[...] = logits[:, :, :n_way]


# ----------------------------------------------------------------------------
# Wrapper helpers
# ----------------------------------------------------------------------------
def _round_up(x, m):
    return ((x + m - 1) // m) * m


def _tile_bytes(rows, cols, itemsize):
    """Padded VMEM footprint of one (rows, cols) tile: sublanes round to the packed
    multiple (8 for 32-bit, 16 for 16-bit, 32 for 8-bit), lanes round to 128."""
    sub_mult = 8 * max(1, 4 // max(itemsize, 1))
    return _round_up(max(rows, 1), sub_mult) * _round_up(max(cols, 1), 128) * itemsize


def _vmem_capacity_bytes():
    try:
        info = pltpu.get_tpu_info()
        cap = getattr(info, "vmem_capacity_bytes", None)
        if cap:
            return int(cap)
    except Exception:
        pass
    return None


def _choose_task_block(T, n_query, n_support, d, n_way, in_itemsize, task_block, budget):
    """Pick how many tasks to process per grid step so double-buffered tiles plus
    in-kernel intermediates fit under `budget`, using padded-layout accounting."""
    kpad = _round_up(n_way, 128)
    # Pallas-pipelined blocks (double buffered), per task.
    pipe = 2 * (_tile_bytes(n_query, d, in_itemsize)          # query
                + _tile_bytes(n_support, d, in_itemsize)      # support
                + _tile_bytes(n_support, 1, 4)                # labels (lane-padded to 128!)
                + _tile_bytes(n_query, n_way, 4))             # logits out
    # In-kernel intermediates, per task (x2 fudge for compiler temps).
    inter = (_tile_bytes(n_support, kpad, in_itemsize)        # onehot
             + _tile_bytes(d, kpad, 4)                        # m_sum (d, kpad)
             + 2 * _tile_bytes(n_query, kpad, 4)              # qm / logits
             + _tile_bytes(n_query, d, 4)                     # q upcast
             + 2 * _tile_bytes(1, kpad, 4)                    # counts / mm
             + _tile_bytes(n_query, 1, 4))                    # aa
    per_task = pipe + 2 * inter
    cap = max(1, budget // max(per_task, 1))
    tb = max(1, min(task_block, T, cap))
    if T >= 2:
        # Keep >= 2 grid steps so the "parallel" axis can shard across v7x's two TCs.
        tb = min(tb, -(-T // 2))
    return tb


def _run_head(kernel_fn, query, support, support_labels, n_way, mult, *, task_block=512):
    T, n_query, d = query.shape
    n_support = support.shape[1]

    vmem_cap = _vmem_capacity_bytes()
    if vmem_cap:
        # 3/4 of physical VMEM: 96 MiB on v5e/v6e (128 MiB parts), 48 MiB on v7x (64 MiB).
        vmem_limit = max((vmem_cap * 3) // 4, 16 * _MIB)
        budget = (vmem_limit * 2) // 3
    else:
        vmem_limit = None                 # unknown part: stay under any scoped default
        budget = 10 * _MIB

    tb = _choose_task_block(T, n_query, n_support, d, n_way,
                            jnp.dtype(query.dtype).itemsize, task_block, budget)

    labels = support_labels.astype(jnp.int32).reshape(T, n_support, 1)
    mult = jnp.asarray(mult, jnp.float32).reshape(1)

    cp_kwargs = dict(dimension_semantics=("parallel",))
    if vmem_limit is not None:
        cp_kwargs["vmem_limit_bytes"] = int(vmem_limit)

    # TODO(synk): if xprof shows exposed input DMA on 128 MiB parts, add
    # pipeline_mode=pl.Buffered(3) to the query/support BlockSpecs (keep 2 on v7x).
    out = pl.pallas_call(
        kernel_fn,
        out_shape=jax.ShapeDtypeStruct((T, n_query, n_way), jnp.float32),
        grid=(pl.cdiv(T, tb),),                                   # ragged last block OK
        in_specs=[
            pl.BlockSpec(memory_space=pltpu.MemorySpace.SMEM),    # fused scale scalar
            pl.BlockSpec((tb, n_support, 1), lambda i: (i, 0, 0)),   # labels
            pl.BlockSpec((tb, n_query, d), lambda i: (i, 0, 0)),     # query (native dtype)
            pl.BlockSpec((tb, n_support, d), lambda i: (i, 0, 0)),   # support (native dtype)
        ],
        out_specs=pl.BlockSpec((tb, n_query, n_way), lambda i: (i, 0, 0)),
        compiler_params=pltpu.CompilerParams(**cp_kwargs),
    )(mult, labels, query, support)
    return out


class ClassificationHead:
    """JAX/Pallas equivalent of models/classification_heads.py::ClassificationHead."""

    def __init__(self, base_learner="ProtoNet", nfeat=32, enable_scale=True, task_block=512):
        if base_learner == "ProtoNet":
            self._kernel = _protonet_kernel
            self._is_protonet = True
        elif base_learner == "CosineClassfier":
            self._kernel = _cosine_kernel
            self._is_protonet = False
        elif base_learner == "SEGA":
            # TODO(synk): SEGAhead submodules (FeatExemplarAvgBlock, LinearDiag,
            # TransferBasedBlock, SenmanticBlock) are not defined in the reference source.
            raise NotImplementedError("SEGA head dependencies are undefined in the reference module")
        else:
            raise ValueError("Cannot recognize the base learner type")
        self.enable_scale = enable_scale
        self.task_block = task_block
        # nn.Parameter(torch.FloatTensor([1.0])) — deterministic init
        self.scale = jnp.array([1.0], dtype=jnp.float32)

    def __call__(self, query, support, support_labels, n_way, n_shot, normalize=True):
        assert query.ndim == 3 and support.ndim == 3
        assert query.shape[0] == support.shape[0] and query.shape[2] == support.shape[2]
        assert support.shape[1] == n_way * n_shot
        scale = self.scale if self.enable_scale else jnp.ones((1,), jnp.float32)
        if self._is_protonet and normalize:
            mult = scale / jnp.float32(query.shape[2])   # fold the 1/d into the scale
        else:
            mult = scale                                  # CosineClassfier ignores `normalize`
        return _run_head(self._kernel, query, support, support_labels, n_way, mult,
                         task_block=self.task_block)


# ----------------------------------------------------------------------------
# Pure-JAX references (for correctness check)
# ----------------------------------------------------------------------------
def _ref_prototypes(support, labels, n_way):
    onehot = jax.nn.one_hot(labels, n_way, dtype=jnp.float32)        # (T, n_support, n_way)
    counts = jnp.sum(onehot, axis=1)                                 # (T, n_way)
    return jnp.einsum("tsk,tsd->tkd", onehot, support) / counts[:, :, None]


def _ref_protonet(query, support, labels, n_way, normalize, scale):
    d = query.shape[2]
    protos = _ref_prototypes(support, labels, n_way)
    AB = jnp.einsum("tqd,tkd->tqk", query, protos)
    AA = jnp.sum(query * query, axis=2, keepdims=True)
    BB = jnp.sum(protos * protos, axis=2)[:, None, :]
    logits = -(AA - 2.0 * AB + BB)
    if normalize:
        logits = logits / d
    return scale * logits


def _ref_cosine(query, support, labels, n_way, scale):
    protos = _ref_prototypes(support, labels, n_way)
    eps = 1e-12
    q_n = query / jnp.maximum(jnp.linalg.norm(query, axis=2, keepdims=True), eps)
    p_n = protos / jnp.maximum(jnp.linalg.norm(protos, axis=2, keepdims=True), eps)
    return scale * jnp.einsum("tqd,tkd->tqk", q_n, p_n)


# ----------------------------------------------------------------------------
# Main
# ----------------------------------------------------------------------------
if __name__ == "__main__":
    # T=7 with task_block=4 -> grid of 2 blocks with a ragged tail (exercises masked
    # write-back for the out-of-range task row) and 2 parallel steps for megacore.
    tasks_per_batch, n_way, n_shot, n_query, d = 7, 4, 2, 8, 32
    n_support = n_way * n_shot

    key = jax.random.PRNGKey(0)
    kq, ks = jax.random.split(key)
    query = jax.random.normal(kq, (tasks_per_batch, n_query, d), dtype=jnp.float32)
    support = jax.random.normal(ks, (tasks_per_batch, n_support, d), dtype=jnp.float32)
    # each class gets exactly n_shot support examples
    support_labels = jnp.tile(jnp.arange(n_way, dtype=jnp.int32), (tasks_per_batch, n_shot))

    # ProtoNet head
    head_proto = ClassificationHead("ProtoNet", nfeat=d, enable_scale=True, task_block=4)
    out_proto = jax.block_until_ready(
        head_proto(query, support, support_labels, n_way, n_shot, normalize=True))
    ref_proto = _ref_protonet(query, support, support_labels, n_way, True, 1.0)
    np.testing.assert_allclose(np.asarray(out_proto), np.asarray(ref_proto), rtol=1e-4, atol=1e-4)

    # Cosine head
    head_cos = ClassificationHead("CosineClassfier", nfeat=d, enable_scale=True, task_block=4)
    out_cos = jax.block_until_ready(
        head_cos(query, support, support_labels, n_way, n_shot, normalize=True))
    ref_cos = _ref_cosine(query, support, support_labels, n_way, 1.0)
    np.testing.assert_allclose(np.asarray(out_cos), np.asarray(ref_cos), rtol=1e-4, atol=1e-4)

    # bf16 inputs: DMA'd natively and fed to the prototype-sum MXU dot in bf16.
    q16 = query.astype(jnp.bfloat16)
    s16 = support.astype(jnp.bfloat16)
    out_bf16 = jax.block_until_ready(
        head_proto(q16, s16, support_labels, n_way, n_shot, normalize=True))
    ref_bf16 = _ref_protonet(q16.astype(jnp.float32), s16.astype(jnp.float32),
                             support_labels, n_way, True, 1.0)
    np.testing.assert_allclose(np.asarray(out_bf16), np.asarray(ref_bf16), rtol=1e-3, atol=1e-3)

    print("KERNEL_OK")
</pallas_src>

<mosaic_0001>
module attributes {stable_mosaic.version = 11 : i64} {
  func.func @_protonet_kernel(%arg0: i32, %arg1: memref<1xf32, #tpu.memory_space<smem>>, %arg2: memref<4x8x1xi32, #tpu.memory_space<vmem>>, %arg3: memref<4x8x32xf32, #tpu.memory_space<vmem>>, %arg4: memref<4x8x32xf32, #tpu.memory_space<vmem>>, %arg5: memref<4x8x4xf32, #tpu.memory_space<vmem>>) attributes {dimension_semantics = [#tpu.dimension_semantics<parallel>], iteration_bounds = array<i64: 2>, scalar_prefetch = 0 : i64, scratch_operands = 0 : i64, tpu.core_type = #tpu.core_type<tc>, window_params = [{transform_indices = @transform_0, window_bounds = array<i64: 1>}, {transform_indices = @transform_1, window_bounds = array<i64: 4, 8, 1>}, {transform_indices = @transform_2, window_bounds = array<i64: 4, 8, 32>}, {transform_indices = @transform_3, window_bounds = array<i64: 4, 8, 32>}, {transform_indices = @transform_4, window_bounds = array<i64: 4, 8, 4>}]} {
    %c0 = arith.constant 0 : index
    %c0_0 = arith.constant 0 : index
    %c0_1 = arith.constant 0 : index
    %0 = vector.load %arg4[%c0, %c0_0, %c0_1] : memref<4x8x32xf32, #tpu.memory_space<vmem>>, vector<4x8x32xf32>
    %c0_2 = arith.constant 0 : index
    %c0_3 = arith.constant 0 : index
    %c0_4 = arith.constant 0 : index
    %1 = vector.load %arg2[%c0_2, %c0_3, %c0_4] : memref<4x8x1xi32, #tpu.memory_space<vmem>>, vector<4x8x1xi32>
    %2 = tpu.iota {dimensions = array<i32: 2>} : vector<1x1x128xi32>
    %3 = vector.broadcast %1 : vector<4x8x1xi32> to vector<4x8x128xi32>
    %4 = vector.broadcast %2 : vector<1x1x128xi32> to vector<4x8x128xi32>
    %5 = arith.cmpi eq, %3, %4 : vector<4x8x128xi32>
    %cst = arith.constant 1.000000e+00 : f32
    %cst_5 = arith.constant 0.000000e+00 : f32
    %6 = vector.broadcast %cst : f32 to vector<4x8x128xf32>
    %7 = vector.broadcast %cst_5 : f32 to vector<4x8x128xf32>
    %8 = arith.select %5, %6, %7 : vector<4x8x128xi1>, vector<4x8x128xf32>
    %cst_6 = arith.constant dense<0.000000e+00> : vector<4x32x128xf32>
    %9 = tpu.matmul %0, %8, %cst_6 {dimension_numbers = #tpu.dot_dimension_numbers<[1], [1], [2], [2], [0, 0, 0, 2, 1, 2], [0], [0]>} : vector<4x8x32xf32>, vector<4x8x128xf32>, vector<4x32x128xf32> -> vector<4x32x128xf32>
    %cst_7 = arith.constant dense<0.000000e+00> : vector<4x128xf32>
    %10 = vector.multi_reduction <add>, %8, %cst_7 [1] : vector<4x8x128xf32> to vector<4x128xf32>
    %11 = vector.shape_cast %10 : vector<4x128xf32> to vector<4x1x128xf32>
    %cst_8 = arith.constant 1.000000e+00 : f32
    %12 = vector.broadcast %cst_8 : f32 to vector<4x1x128xf32>
    %13 = arith.maximumf %11, %12 : vector<4x1x128xf32>
    %14 = tpu.reciprocal %13 : vector<4x1x128xf32> -> vector<4x1x128xf32>
    %c0_9 = arith.constant 0 : index
    %c0_10 = arith.constant 0 : index
    %c0_11 = arith.constant 0 : index
    %15 = vector.load %arg3[%c0_9, %c0_10, %c0_11] : memref<4x8x32xf32, #tpu.memory_space<vmem>>, vector<4x8x32xf32>
    %cst_12 = arith.constant dense<0.000000e+00> : vector<4x8x128xf32>
    %16 = tpu.matmul %15, %9, %cst_12 {dimension_numbers = #tpu.dot_dimension_numbers<[2], [1], [1], [2], [0, 0, 0, 1, 1, 2], [0], [0]>} : vector<4x8x32xf32>, vector<4x32x128xf32>, vector<4x8x128xf32> -> vector<4x8x128xf32>
    %17 = arith.mulf %15, %15 : vector<4x8x32xf32>
    %cst_13 = arith.constant dense<0.000000e+00> : vector<4x8xf32>
    %18 = vector.multi_reduction <add>, %17, %cst_13 [2] : vector<4x8x32xf32> to vector<4x8xf32>
    %19 = vector.shape_cast %18 : vector<4x8xf32> to vector<4x8x1xf32>
    %20 = arith.mulf %9, %9 : vector<4x32x128xf32>
    %cst_14 = arith.constant dense<0.000000e+00> : vector<4x128xf32>
    %21 = vector.multi_reduction <add>, %20, %cst_14 [1] : vector<4x32x128xf32> to vector<4x128xf32>
    %22 = vector.shape_cast %21 : vector<4x128xf32> to vector<4x1x128xf32>
    %c0_15 = arith.constant 0 : index
    %23 = memref.load %arg1[%c0_15] : memref<1xf32, #tpu.memory_space<smem>>
    %24 = vector.broadcast %14 : vector<4x1x128xf32> to vector<4x8x128xf32>
    %25 = arith.mulf %16, %24 : vector<4x8x128xf32>
    %cst_16 = arith.constant 2.000000e+00 : f32
    %26 = vector.broadcast %cst_16 : f32 to vector<4x8x128xf32>
    %27 = arith.mulf %26, %25 : vector<4x8x128xf32>
    %28 = vector.broadcast %19 : vector<4x8x1xf32> to vector<4x8x128xf32>
    %29 = arith.subf %28, %27 : vector<4x8x128xf32>
    %30 = arith.mulf %14, %14 : vector<4x1x128xf32>
    %31 = arith.mulf %22, %30 : vector<4x1x128xf32>
    %32 = vector.broadcast %31 : vector<4x1x128xf32> to vector<4x8x128xf32>
    %33 = arith.addf %29, %32 : vector<4x8x128xf32>
    %cst_17 = arith.constant 0.000000e+00 : f32
    %34 = vector.broadcast %cst_17 : f32 to vector<4x8x128xf32>
    %35 = arith.subf %34, %33 : vector<4x8x128xf32>
    %36 = vector.broadcast %23 : f32 to vector<4x8x128xf32>
    %37 = arith.mulf %35, %36 : vector<4x8x128xf32>
    %38 = vector.extract_strided_slice %37 {offsets = [0, 0, 0], sizes = [4, 8, 4], strides = [1, 1, 1]} : vector<4x8x128xf32> to vector<4x8x4xf32>
    %c0_18 = arith.constant 0 : index
    %c0_19 = arith.constant 0 : index
    %c0_20 = arith.constant 0 : index
    %39 = vector.load %arg5[%c0_18, %c0_19, %c0_20] : memref<4x8x4xf32, #tpu.memory_space<vmem>>, vector<4x8x4xf32>
    tpu.vector_store %arg5[%c0_18, %c0_19, %c0_20], %38 {strides = array<i32>} : memref<4x8x4xf32, #tpu.memory_space<vmem>>, vector<4x8x4xf32>,
    return
  }
  func.func @transform_0(%arg0: i32) -> i32 {
    %c0_i32 = arith.constant 0 : i32
    %c0_i32_0 = arith.constant 0 : i32
    return %c0_i32 : i32
  }
  func.func @transform_1(%arg0: i32) -> (i32, i32, i32) {
    %c0_i32 = arith.constant 0 : i32
    %c0_i32_0 = arith.constant 0 : i32
    %c0_i32_1 = arith.constant 0 : i32
    return %arg0, %c0_i32, %c0_i32_0 : i32, i32, i32
  }
  func.func @transform_2(%arg0: i32) -> (i32, i32, i32) {
    %c0_i32 = arith.constant 0 : i32
    %c0_i32_0 = arith.constant 0 : i32
    %c0_i32_1 = arith.constant 0 : i32
    return %arg0, %c0_i32, %c0_i32_0 : i32, i32, i32
  }
  func.func @transform_3(%arg0: i32) -> (i32, i32, i32) {
    %c0_i32 = arith.constant 0 : i32
    %c0_i32_0 = arith.constant 0 : i32
    %c0_i32_1 = arith.constant 0 : i32
    return %arg0, %c0_i32, %c0_i32_0 : i32, i32, i32
  }
  func.func @transform_4(%arg0: i32) -> (i32, i32, i32) {
    %c0_i32 = arith.constant 0 : i32
    %c0_i32_0 = arith.constant 0 : i32
    %c0_i32_1 = arith.constant 0 : i32
    return %arg0, %c0_i32, %c0_i32_0 : i32, i32, i32
  }
}

</mosaic_0001>

<llo_original>
// kernel: tpu_custom_call.1
$region0: #{tpu_custom_call.1}
  #allocation0 [shape = 'u32[]', space=smem, size = 0x4, offset = 0x4, fixed_abs, tag = 'smem constant byte address 0x4 - core index']
  #allocation1 [shape = 'u32[144,128]{1,0:T(1,128)}', space=vmem, size = 0x12000, scoped, tag = 'internal scratch']
  #allocation2 [shape = 'f32[1]{0:T(128)S(6)}', space=smem, size = 0x200, scoped, tag = 'scoped memory for tpu_custom_call.1']
  %s0 = inlined_call_operand.<no memory space> [shape: f32[1], index: 0, kind: input, shape index: {}]
  %s1 = inlined_call_operand.vmem [shape: s32[7,8,1], index: 1, kind: input, shape index: {}]
  %s2 = inlined_call_operand.vmem [shape: f32[7,8,32], index: 2, kind: input, shape index: {}]
  %s3 = inlined_call_operand.hbm [shape: f32[7,8,32], index: 3, kind: input, shape index: {}]
  %s4 = inlined_call_operand.vmem [shape: f32[7,8,4], index: 4, kind: output, shape index: {}]
  %s5 = sld [smem:[#allocation0]]
  $region101: #{tpu_custom_call.1} parent=0
    _
  %s7 = ssub.s32 1, %s5
  %s8 = scalar_select 0, %s7, %s5
  %9 = sst [smem:[#allocation2]] %s0
  $region1: #{tpu_custom_call.1} parent=0
    #allocation3 [shape = 'u8[32768]{0}', space=vmem, size = 0x8000, scoped, tag = 'input window, operand 3']
    #allocation4 [shape = 's32[2]{0}', space=sflag, size = 0x8, scoped, tag = 'scoped memory for tpu_custom_call.1']
    #allocation5 [shape = 'u8[32768]{0}', space=vmem, size = 0x8000, scoped, tag = 'output window, operand 0']
    %10 = vsyncpa [#allocation4], 0
    %s11 = scalar_lea.sflag [#allocation4], 1
    %12 = vsyncpa %s11, 0
    loop: start=0, step=1, limit=4
    $region2: #{tpu_custom_call.1} parent=1 // loop_pre_header
      _
    $region3: #{tpu_custom_call.1} parent=1 // loop_header
      %s14 = sphi 0, %s18
      %p15 = scmp.ge.s32.totalorder %s14, 4
      %s22 = sphi 0, %s22
      %s24 = sphi 0, %s22
      %s25 = sphi 0, %s24
      %s39 = sphi 0, %s25
      %s45 = sphi 0, %s47
      %s48 = sphi 0, %s45
      %s49 = sphi 0, %s48
      %s65 = sphi 0, %s49
      %s71 = sphi 0, %s73
      %s74 = sphi 0, %s71
      %s75 = sphi 0, %s74
      %s91 = sphi 0, %s75
      %s97 = sphi 0, %s99
      %s100 = sphi 0, %s97
      %s101 = sphi 0, %s100
      %s117 = sphi 0, %s101
      %s123 = sphi 0, %s125
      %s126 = sphi 0, %s123
      %s127 = sphi 0, %s126
      %s143 = sphi 0, %s127
    $region4: #{tpu_custom_call.1} parent=1 // loop_header_branch
      %17 = sbr.rel (%p15) target = $region8
    $region5: #{tpu_custom_call.1} parent=1 // loop_body
      %s19 = ssub.s32 %s14, 1
      %s20 = ssub.s32 %s14, 2
      %s21 = sadd.s32 %s14, 1
      %s23 = sadd.s32 %s22, 1
      %p26 = scmp.eq.s32.totalorder %s14, 1
      %p27 = scmp.ne.s32.totalorder %s22, %s24
      %p28 = scmp.eq.s32.totalorder %s14, 0
      %p29 = por %p27, %p28
      %p30 = scmp.ne.s32.totalorder %s22, %s24
      %p31 = scmp.eq.s32.totalorder %s19, 1
      %p32 = por %p30, %p31
      %p33 = scmp.ne.s32.totalorder %s24, %s25
      %p34 = scmp.eq.s32.totalorder %s19, 0
      %p35 = por %p33, %p34
      %p36 = scmp.ne.s32.totalorder %s24, %s25
      %p37 = scmp.eq.s32.totalorder %s20, 1
      %p38 = por %p36, %p37
      %p40 = scmp.ne.s32.totalorder %s25, %s39
      %p41 = scmp.eq.s32.totalorder %s20, 0
      %p42 = por %p40, %p41
      %s43 = ssub.s32 %s14, %s21
      %p44 = scmp.eq.s32.totalorder %s43, 0
      %s46 = sadd.s32 %s45, 1
      %s47 = scalar_select %p44, %s45, %s46
      %p50 = pneg %p44
      %p51 = scmp.eq.s32.totalorder %s14, 1
      %p52 = por %p50, %p51
      %p53 = scmp.ne.s32.totalorder %s45, %s48
      %p54 = scmp.eq.s32.totalorder %s14, 0
      %p55 = por %p53, %p54
      %p56 = scmp.ne.s32.totalorder %s45, %s48
      %p57 = scmp.eq.s32.totalorder %s19, 1
      %p58 = por %p56, %p57
      %p59 = scmp.ne.s32.totalorder %s48, %s49
      %p60 = scmp.eq.s32.totalorder %s19, 0
      %p61 = por %p59, %p60
      %p62 = scmp.ne.s32.totalorder %s48, %s49
      %p63 = scmp.eq.s32.totalorder %s20, 1
      %p64 = por %p62, %p63
      %p66 = scmp.ne.s32.totalorder %s49, %s65
      %p67 = scmp.eq.s32.totalorder %s20, 0
      %p68 = por %p66, %p67
      %s69 = ssub.s32 %s14, %s21
      %p70 = scmp.eq.s32.totalorder %s69, 0
      %s72 = sadd.s32 %s71, 1
      %s73 = scalar_select %p70, %s71, %s72
      %p76 = pneg %p70
      %p77 = scmp.eq.s32.totalorder %s14, 1
      %p78 = por %p76, %p77
      %p79 = scmp.ne.s32.totalorder %s71, %s74
      %p80 = scmp.eq.s32.totalorder %s14, 0
      %p81 = por %p79, %p80
      %p82 = scmp.ne.s32.totalorder %s71, %s74
      %p83 = scmp.eq.s32.totalorder %s19, 1
      %p84 = por %p82, %p83
      %p85 = scmp.ne.s32.totalorder %s74, %s75
      %p86 = scmp.eq.s32.totalorder %s19, 0
      %p87 = por %p85, %p86
      %p88 = scmp.ne.s32.totalorder %s74, %s75
      %p89 = scmp.eq.s32.totalorder %s20, 1
      %p90 = por %p88, %p89
      %p92 = scmp.ne.s32.totalorder %s75, %s91
      %p93 = scmp.eq.s32.totalorder %s20, 0
      %p94 = por %p92, %p93
      %s95 = ssub.s32 %s14, %s21
      %p96 = scmp.eq.s32.totalorder %s95, 0
      %s98 = sadd.s32 %s97, 1
      %s99 = scalar_select %p96, %s97, %s98
      %p102 = pneg %p96
      %p103 = scmp.eq.s32.totalorder %s14, 1
      %p104 = por %p102, %p103
      %p105 = scmp.ne.s32.totalorder %s97, %s100
      %p106 = scmp.eq.s32.totalorder %s14, 0
      %p107 = por %p105, %p106
      %p108 = scmp.ne.s32.totalorder %s97, %s100
      %p109 = scmp.eq.s32.totalorder %s19, 1
      %p110 = por %p108, %p109
      %p111 = scmp.ne.s32.totalorder %s100, %s101
      %p112 = scmp.eq.s32.totalorder %s19, 0
      %p113 = por %p111, %p112
      %p114 = scmp.ne.s32.totalorder %s100, %s101
      %p115 = scmp.eq.s32.totalorder %s20, 1
      %p116 = por %p114, %p115
      %p118 = scmp.ne.s32.totalorder %s101, %s117
      %p119 = scmp.eq.s32.totalorder %s20, 0
      %p120 = por %p118, %p119
      %s121 = ssub.s32 %s14, %s21
      %p122 = scmp.eq.s32.totalorder %s121, 0
      %s124 = sadd.s32 %s123, 1
      %s125 = scalar_select %p122, %s123, %s124
      %p128 = pneg %p122
      %p129 = scmp.eq.s32.totalorder %s14, 1
      %p130 = por %p128, %p129
      %p131 = scmp.ne.s32.totalorder %s123, %s126
      %p132 = scmp.eq.s32.totalorder %s14, 0
      %p133 = por %p131, %p132
      %p134 = scmp.ne.s32.totalorder %s123, %s126
      %p135 = scmp.eq.s32.totalorder %s19, 1
      %p136 = por %p134, %p135
      %p137 = scmp.ne.s32.totalorder %s126, %s127
      %p138 = scmp.eq.s32.totalorder %s19, 0
      %p139 = por %p137, %p138
      %p140 = scmp.ne.s32.totalorder %s126, %s127
      %p141 = scmp.eq.s32.totalorder %s20, 1
      %p142 = por %p140, %p141
      %p144 = scmp.ne.s32.totalorder %s127, %s143
      %p145 = scmp.eq.s32.totalorder %s20, 0
      %p146 = por %p144, %p145
      %p147 = scmp.le.s32.totalorder 1, %s14
      %p148 = scmp.lt.s32.totalorder %s14, 3
      %p149 = pnand %p147, %p148
      %p150 = pneg %p149
      // Predicated region
      $region9: #{tpu_custom_call.1} parent=5 // pred_check
        _
      $region10: #{tpu_custom_call.1} parent=5 // pred_check_branch
        %152 = sbr.rel (%p149) target = $region12
      $region11: #{tpu_custom_call.1} parent=5 // pred_region
        %s153 = ssub.s32 %s14, 1
        // Predicated region
        $region13: #{tpu_custom_call.1} parent=11 // pred_check
          %p154 = pneg %p35
        $region14: #{tpu_custom_call.1} parent=11 // pred_check_branch
          %156 = sbr.rel (%p154) target = $region16
        $region15: #{tpu_custom_call.1} parent=11 // pred_region
          _
        $region16: #{tpu_custom_call.1} parent=11 // pred_fallthru
          _
      $region12: #{tpu_custom_call.1} parent=5 // pred_fallthru
        _
      %p157 = scmp.lt.s32.totalorder %s14, 2
      // Predicated region
      $region17: #{tpu_custom_call.1} parent=5 // pred_check
        %p158 = pneg %p157
      $region18: #{tpu_custom_call.1} parent=5 // pred_check_branch
        %160 = sbr.rel (%p158) target = $region20
      $region19: #{tpu_custom_call.1} parent=5 // pred_region
        // Predicated region
        $region21: #{tpu_custom_call.1} parent=19 // pred_check
          %p161 = pneg %p55
        $region22: #{tpu_custom_call.1} parent=19 // pred_check_branch
          %163 = sbr.rel (%p161) target = $region24
        $region23: #{tpu_custom_call.1} parent=19 // pred_region
          %s164 = smul.u32 4, %s14
          %s165 = ssub.s32 7, %s164
          %p166 = scmp.lt.s32.totalorder %s165, 4
          %s167 = scalar_select %p166, %s165, 4
          %s168 = smul.u32 128, %s167
          %p169 = scmp.lt.s32.totalorder %s164, 6
          %s170 = scalar_select %p169, %s164, 6
          %s171 = smul.addr %s170, 8
          %s172 = scalar_lea.vmem %s1, %s171
          %s173 = smul.u32 4, %s14
          %s174 = ssub.s32 7, %s173
          %p175 = scmp.lt.s32.totalorder %s174, 4
          %s176 = scalar_select %p175, %s174, 4
          %s177 = smul.u32 128, %s176
        $region24: #{tpu_custom_call.1} parent=19 // pred_fallthru
          _
        // Predicated region
        $region25: #{tpu_custom_call.1} parent=19 // pred_check
          %p178 = pneg %p81
        $region26: #{tpu_custom_call.1} parent=19 // pred_check_branch
          %180 = sbr.rel (%p178) target = $region28
        $region27: #{tpu_custom_call.1} parent=19 // pred_region
          %s181 = smul.u32 4, %s14
          %s182 = ssub.s32 7, %s181
          %p183 = scmp.lt.s32.totalorder %s182, 4
          %s184 = scalar_select %p183, %s182, 4
          %s185 = smul.u32 128, %s184
          %p186 = scmp.lt.s32.totalorder %s181, 6
          %s187 = scalar_select %p186, %s181, 6
          %s188 = smul.addr %s187, 8
          %s189 = scalar_lea.vmem %s2, %s188
          %s190 = smul.u32 4, %s14
          %s191 = ssub.s32 7, %s190
          %p192 = scmp.lt.s32.totalorder %s191, 4
          %s193 = scalar_select %p192, %s191, 4
          %s194 = smul.u32 128, %s193
        $region28: #{tpu_custom_call.1} parent=19 // pred_fallthru
          _
        // Predicated region
        $region29: #{tpu_custom_call.1} parent=19 // pred_check
          %p195 = pneg %p107
        $region30: #{tpu_custom_call.1} parent=19 // pred_check_branch
          %197 = sbr.rel (%p195) target = $region32
        $region31: #{tpu_custom_call.1} parent=19 // pred_region
          %s198 = sand.u32 %s97, 1
          %s199 = scalar_lea.sflag [#allocation4], %s198
          %s200 = sand.u32 %s97, 1
          %s201 = smul.addr %s200, 32
          %s202 = scalar_lea.vmem [#allocation3], %s201
          %s203 = smul.u32 4, %s14
          %s204 = ssub.s32 7, %s203
          %p205 = scmp.lt.s32.totalorder %s204, 4
          %s206 = scalar_select %p205, %s204, 4
          %s207 = smul.u32 128, %s206
          %s209 = ssub.s32 512, %s207
          %210 = vsyncadd %s199, %s209
          %p211 = scmp.ne.s32.totalorder 0, %s207
          %s212 = smul.addr %s203, 128
          %s213 = scalar_lea.hbm %s3, %s212
          %s214 = smul.u32 8, %s206
          %s215 = sshll.u32 %s202, 4
          %s216 = int_to_ptr.vmem [resolvable:$true] %s215
          %s217 = sshll.u32 %s214, 4
          %221 = dma.hbm_to_vmem [thread:$0]  (%p211), %s213, %s217, %s216, %s199, 128, 128, 8
        $region32: #{tpu_custom_call.1} parent=19 // pred_fallthru
          _
      $region20: #{tpu_custom_call.1} parent=5 // pred_fallthru
        _
      %p222 = scmp.le.s32.totalorder 1, %s14
      %p223 = scmp.lt.s32.totalorder %s14, 3
      %p224 = pnand %p222, %p223
      %p225 = pneg %p224
      // Predicated region
      $region33: #{tpu_custom_call.1} parent=5 // pred_check
        _
      $region34: #{tpu_custom_call.1} parent=5 // pred_check_branch
        %227 = sbr.rel (%p224) target = $region36
      $region35: #{tpu_custom_call.1} parent=5 // pred_region
        %s228 = ssub.s32 %s14, 1
        %s229 = sand.u32 %s100, 1
        %s230 = scalar_lea.sflag [#allocation4], %s229
        %s231 = sand.u32 %s100, 1
        %s232 = smul.addr %s231, 32
        %s233 = scalar_lea.vmem [#allocation3], %s232
        // Predicated region
        $region37: #{tpu_custom_call.1} parent=35 // pred_check
          %p234 = pneg %p113
        $region38: #{tpu_custom_call.1} parent=35 // pred_check_branch
          %236 = sbr.rel (%p234) target = $region40
        $region39: #{tpu_custom_call.1} parent=35 // pred_region
          %237 = dma.done %s230, 512
        $region40: #{tpu_custom_call.1} parent=35 // pred_fallthru
          _
        %p238 = pneg %p35
        %p239 = pneg %p32
        %s240 = smul.u32 4, %s19
        %s241 = ssub.s32 7, %s240
        %p242 = scmp.lt.s32.totalorder %s241, 4
        %s243 = scalar_select %p242, %s241, 4
        %s244 = smul.u32 128, %s243
        %p245 = scmp.lt.s32.totalorder %s240, 6
        %s246 = scalar_select %p245, %s240, 6
        %s247 = smul.addr %s246, 8
        %s248 = scalar_lea.vmem %s1, %s247
        %p249 = pneg %p61
        %p250 = pneg %p58
        %s251 = smul.u32 4, %s19
        %s252 = ssub.s32 7, %s251
        %p253 = scmp.lt.s32.totalorder %s252, 4
        %s254 = scalar_select %p253, %s252, 4
        %s255 = smul.u32 128, %s254
        %p256 = scmp.lt.s32.totalorder %s251, 6
        %s257 = scalar_select %p256, %s251, 6
        %s258 = smul.addr %s257, 8
        %s259 = scalar_lea.vmem %s2, %s258
        %p260 = pneg %p87
        %p261 = pneg %p84
        %s262 = sand.u32 %s100, 1
        %s263 = scalar_lea.sflag [#allocation4], %s262
        %s264 = sand.u32 %s100, 1
        %s265 = smul.addr %s264, 32
        %s266 = scalar_lea.vmem [#allocation3], %s265
        %p267 = pneg %p113
        %p268 = pneg %p110
        %p269 = pneg %p139
        %p270 = pneg %p136
        %s271 = sand.u32 %s126, 1
        %s272 = sand.u32 %s126, 1
        %s273 = smul.addr %s272, 32
        %s274 = scalar_lea.vmem [#allocation5], %s273
        %s275 = smul.u32 4, %s19
        %s276 = ssub.s32 7, %s275
        %p277 = scmp.lt.s32.totalorder %s276, 4
        %s278 = scalar_select %p277, %s276, 4
        %s279 = smul.u32 128, %s278
        %p280 = scmp.lt.s32.totalorder %s275, 6
        %s281 = scalar_select %p280, %s275, 6
        %s282 = smul.addr %s281, 8
        %s283 = scalar_lea.vmem %s1, %s282
        %s284 = smul.u32 4, %s19
        %s285 = ssub.s32 7, %s284
        %p286 = scmp.lt.s32.totalorder %s285, 4
        %s287 = scalar_select %p286, %s285, 4
        %s288 = smul.u32 128, %s287
        %s289 = smul.u32 4, %s19
        %s290 = ssub.s32 7, %s289
        %p291 = scmp.lt.s32.totalorder %s290, 4
        %s292 = scalar_select %p291, %s290, 4
        %s293 = smul.u32 128, %s292
        %p294 = scmp.lt.s32.totalorder %s289, 6
        %s295 = scalar_select %p294, %s289, 6
        %s296 = smul.addr %s295, 8
        %s297 = scalar_lea.vmem %s2, %s296
        %s298 = smul.u32 4, %s19
        %s299 = ssub.s32 7, %s298
        %p300 = scmp.lt.s32.totalorder %s299, 4
        %s301 = scalar_select %p300, %s299, 4
        %s302 = smul.u32 128, %s301
        %s303 = smul.u32 4, %s19
        %s304 = ssub.s32 7, %s303
        %p305 = scmp.lt.s32.totalorder %s304, 4
        %s306 = scalar_select %p305, %s304, 4
        %s307 = smul.u32 128, %s306
        %s308 = smul.u32 4, %s19
        %s309 = ssub.s32 7, %s308
        %p310 = scmp.lt.s32.totalorder %s309, 4
        %s311 = scalar_select %p310, %s309, 4
        %s312 = smul.u32 128, %s311
        %v313 = vld [vmem:[%s233] sm:$0xff]
        %v314 = vld [vmem:[%s233 + $0x8] sm:$0xff]
        %v315 = vld [vmem:[%s233 + $0x10] sm:$0xff]
        %v316 = vld [vmem:[%s233 + $0x18] sm:$0xff]
        %v317 = vld [vmem:[%s283] sm:$0xff]
        %v318 = vld [vmem:[%s283 + $0x8] sm:$0xff]
        %v319 = vld [vmem:[%s283 + $0x10] sm:$0xff]
        %v320 = vld [vmem:[%s283 + $0x18] sm:$0xff]
        %v321 = vlaneseq
        %v322 = vand.u32 %v321, 127
        %323 = vset.pattern.permute.xlu0 0
        %324 = vperm.xlu0 %323, %v317
        %v325 = vpop.permute.xlu0 %324
        %326 = vset.pattern.permute.xlu0 0
        %327 = vperm.xlu0 %326, %v318
        %v328 = vpop.permute.xlu0 %327
        %329 = vset.pattern.permute.xlu0 0
        %330 = vperm.xlu0 %329, %v319
        %v331 = vpop.permute.xlu0 %330
        %332 = vset.pattern.permute.xlu0 0
        %333 = vperm.xlu0 %332, %v320
        %v334 = vpop.permute.xlu0 %333
        %vm335 = vcmp.eq.s32.totalorder %v325, %v322
        %vm336 = vcmp.eq.s32.totalorder %v328, %v322
        %vm337 = vcmp.eq.s32.totalorder %v331, %v322
        %vm338 = vcmp.eq.s32.totalorder %v334, %v322
        %v339 = vsel %vm335, 1.0, 0.0
        %v340 = vsel %vm336, 1.0, 0.0
        %v341 = vsel %vm337, 1.0, 0.0
        %v342 = vsel %vm338, 1.0, 0.0
        %343 = vxpose.xlu0.b32.start [1/16] %v313, 128
        %344 = vxpose.xlu0.b32.cont [2/16] 0.0, 128
        %345 = vxpose.xlu0.b32.cont [3/16] 0.0, 128
        %346 = vxpose.xlu0.b32.cont [4/16] 0.0, 128
        %347 = vxpose.xlu0.b32.cont [5/16] 0.0, 128
        %348 = vxpose.xlu0.b32.cont [6/16] 0.0, 128
        %349 = vxpose.xlu0.b32.cont [7/16] 0.0, 128
        %350 = vxpose.xlu0.b32.cont [8/16] 0.0, 128
        %351 = vxpose.xlu0.b32.cont [9/16] 0.0, 128
        %352 = vxpose.xlu0.b32.cont [10/16] 0.0, 128
        %353 = vxpose.xlu0.b32.cont [11/16] 0.0, 128
        %354 = vxpose.xlu0.b32.cont [12/16] 0.0, 128
        %355 = vxpose.xlu0.b32.cont [13/16] 0.0, 128
        %356 = vxpose.xlu0.b32.cont [14/16] 0.0, 128
        %357 = vxpose.xlu0.b32.cont [15/16] 0.0, 128
        %358 = vxpose.xlu0.b32.end [16/16] 0.0, 128
        %v359 = vpop.trf.xlu0
        %v360 = vpop.trf.xlu0
        %v361 = vpop.trf.xlu0
        %v362 = vpop.trf.xlu0
        %v363 = vpop.trf.xlu0
        %v364 = vpop.trf.xlu0
        %v365 = vpop.trf.xlu0
        %v366 = vpop.trf.xlu0
        %v367 = vpop.trf.xlu0
        %v368 = vpop.trf.xlu0
        %v369 = vpop.trf.xlu0
        %v370 = vpop.trf.xlu0
        %v371 = vpop.trf.xlu0
        %v372 = vpop.trf.xlu0
        %v373 = vpop.trf.xlu0
        %v374 = vpop.trf.xlu0
        %vm375 = vcmask 64512
        %v377 = vsel %vm375, %v359, 0
        %v380 = vsel %vm375, %v360, 0
        %v383 = vsel %vm375, %v361, 0
        %v386 = vsel %vm375, %v362, 0
        %388 = vmatprep.subr.mxu0 0.0
        %389 = vmatpush1.msra.mxu0 0.0
        %390 = vmatprep.subr.mxu0 0.0
        %391 = vmatpush1.msra.mxu0 0.0
        %392 = vmatprep.subr.mxu0 0.0
        %393 = vmatpush1.msra.mxu0 0.0
        %394 = vmatprep.subr.mxu0 0.0
        %395 = vmatpush1.msra.mxu0 0.0
        %396 = vmatprep.subr.mxu0 0.0
        %397 = vmatpush1.msra.mxu0 0.0
        %398 = vmatprep.subr.mxu0 0.0
        %399 = vmatpush1.msra.mxu0 0.0
        %400 = vmatprep.subr.mxu0 0.0
        %401 = vmatpush1.msra.mxu0 0.0
        %402 = vmatprep.subr.mxu0 0.0
        %403 = vmatpush1.msra.mxu0 0.0
        %404 = vmatprep.subr.mxu0 0.0
        %405 = vmatpush1.msra.mxu0 0.0
        %406 = vmatprep.subr.mxu0 0.0
        %407 = vmatpush1.msra.mxu0 0.0
        %408 = vmatprep.subr.mxu0 0.0
        %409 = vmatpush1.msra.mxu0 0.0
        %410 = vmatprep.subr.mxu0 0.0
        %411 = vmatpush1.msra.mxu0 0.0
        %412 = vmatprep.subr.mxu0 0.0
        %413 = vmatpush1.msra.mxu0 0.0
        %414 = vmatprep.subr.mxu0 0.0
        %415 = vmatpush1.msra.mxu0 0.0
        %416 = vmatprep.subr.mxu0 0.0
        %417 = vmatpush1.msra.mxu0 0.0
        %418 = vmatprep.subr.mxu0 0.0
        %419 = vmatpush1.msra.mxu0 %v339
        %420 = vmatprep.subr.mxu0 0.0
        %421 = vmatpush2.msra.mxu0 0.0
        %422 = vmatprep.subr.mxu0 0.0
        %423 = vmatpush2.msra.mxu0 0.0
        %424 = vmatprep.subr.mxu0 0.0
        %425 = vmatpush2.msra.mxu0 0.0
        %426 = vmatprep.subr.mxu0 0.0
        %427 = vmatpush2.msra.mxu0 0.0
        %428 = vmatprep.subr.mxu0 0.0
        %429 = vmatpush2.msra.mxu0 0.0
        %430 = vmatprep.subr.mxu0 0.0
        %431 = vmatpush2.msra.mxu0 0.0
        %432 = vmatprep.subr.mxu0 0.0
        %433 = vmatpush2.msra.mxu0 0.0
        %434 = vmatprep.subr.mxu0 0.0
        %435 = vmatpush2.msra.mxu0 0.0
        %436 = vmatprep.subr.mxu0 0.0
        %437 = vmatpush2.msra.mxu0 0.0
        %438 = vmatprep.subr.mxu0 0.0
        %439 = vmatpush2.msra.mxu0 0.0
        %440 = vmatprep.subr.mxu0 0.0
        %441 = vmatpush2.msra.mxu0 0.0
        %442 = vmatprep.subr.mxu0 0.0
        %443 = vmatpush2.msra.mxu0 0.0
        %444 = vmatprep.subr.mxu0 0.0
        %445 = vmatpush2.msra.mxu0 0.0
        %446 = vmatprep.subr.mxu0 0.0
        %447 = vmatpush2.msra.mxu0 0.0
        %448 = vmatprep.subr.mxu0 0.0
        %449 = vmatpush2.msra.mxu0 0.0
        %450 = vmatprep.subr.mxu0 0.0
        %451 = vmatpush2.msra.mxu0 0.0
        %452 = vmatprep.mubr.f32.mxu0 0.0
        %453 = vmatmul.mubr.f32.gmra.mxu0 %v377
        %v454 = vpop.f32.mrf.mxu0
        %v455 = vadd.f32 0.0, %v454
        %v456 = vpop.f32.mrf.mxu0
        %457 = vmatprep.mubr.f32.mxu0 0.0
        %458 = vmatmul.mubr.f32.gmra.mxu0 %v380
        %v459 = vpop.f32.mrf.mxu0
        %v460 = vadd.f32 0.0, %v459
        %v461 = vpop.f32.mrf.mxu0
        %462 = vmatprep.mubr.f32.mxu0 0.0
        %463 = vmatmul.mubr.f32.gmra.mxu0 %v383
        %v464 = vpop.f32.mrf.mxu0
        %v465 = vadd.f32 0.0, %v464
        %v466 = vpop.f32.mrf.mxu0
        %467 = vmatprep.mubr.f32.mxu0 0.0
        %468 = vmatmul.mubr.f32.gmra.mxu0 %v386
        %v469 = vpop.f32.mrf.mxu0
        %v470 = vadd.f32 0.0, %v469
        %v471 = vpop.f32.mrf.mxu0
        %472 = vdwg.mxu0
        %473 = vxpose.xlu0.b32.start [1/16] %v314, 128
        %474 = vxpose.xlu0.b32.cont [2/16] 0.0, 128
        %475 = vxpose.xlu0.b32.cont [3/16] 0.0, 128
        %476 = vxpose.xlu0.b32.cont [4/16] 0.0, 128
        %477 = vxpose.xlu0.b32.cont [5/16] 0.0, 128
        %478 = vxpose.xlu0.b32.cont [6/16] 0.0, 128
        %479 = vxpose.xlu0.b32.cont [7/16] 0.0, 128
        %480 = vxpose.xlu0.b32.cont [8/16] 0.0, 128
        %481 = vxpose.xlu0.b32.cont [9/16] 0.0, 128
        %482 = vxpose.xlu0.b32.cont [10/16] 0.0, 128
        %483 = vxpose.xlu0.b32.cont [11/16] 0.0, 128
        %484 = vxpose.xlu0.b32.cont [12/16] 0.0, 128
        %485 = vxpose.xlu0.b32.cont [13/16] 0.0, 128
        %486 = vxpose.xlu0.b32.cont [14/16] 0.0, 128
        %487 = vxpose.xlu0.b32.cont [15/16] 0.0, 128
        %488 = vxpose.xlu0.b32.end [16/16] 0.0, 128
        %v489 = vpop.trf.xlu0
        %v490 = vpop.trf.xlu0
        %v491 = vpop.trf.xlu0
        %v492 = vpop.trf.xlu0
        %v493 = vpop.trf.xlu0
        %v494 = vpop.trf.xlu0
        %v495 = vpop.trf.xlu0
        %v496 = vpop.trf.xlu0
        %v497 = vpop.trf.xlu0
        %v498 = vpop.trf.xlu0
        %v499 = vpop.trf.xlu0
        %v500 = vpop.trf.xlu0
        %v501 = vpop.trf.xlu0
        %v502 = vpop.trf.xlu0
        %v503 = vpop.trf.xlu0
        %v504 = vpop.trf.xlu0
        %v506 = vsel %vm375, %v489, 0
        %v509 = vsel %vm375, %v490, 0
        %v512 = vsel %vm375, %v491, 0
        %v515 = vsel %vm375, %v492, 0
        %517 = vmatprep.subr.mxu0 0.0
        %518 = vmatpush1.msra.mxu0 0.0
        %519 = vmatprep.subr.mxu0 0.0
        %520 = vmatpush1.msra.mxu0 0.0
        %521 = vmatprep.subr.mxu0 0.0
        %522 = vmatpush1.msra.mxu0 0.0
        %523 = vmatprep.subr.mxu0 0.0
        %524 = vmatpush1.msra.mxu0 0.0
        %525 = vmatprep.subr.mxu0 0.0
        %526 = vmatpush1.msra.mxu0 0.0
        %527 = vmatprep.subr.mxu0 0.0
        %528 = vmatpush1.msra.mxu0 0.0
        %529 = vmatprep.subr.mxu0 0.0
        %530 = vmatpush1.msra.mxu0 0.0
        %531 = vmatprep.subr.mxu0 0.0
        %532 = vmatpush1.msra.mxu0 0.0
        %533 = vmatprep.subr.mxu0 0.0
        %534 = vmatpush1.msra.mxu0 0.0
        %535 = vmatprep.subr.mxu0 0.0
        %536 = vmatpush1.msra.mxu0 0.0
        %537 = vmatprep.subr.mxu0 0.0
        %538 = vmatpush1.msra.mxu0 0.0
        %539 = vmatprep.subr.mxu0 0.0
        %540 = vmatpush1.msra.mxu0 0.0
        %541 = vmatprep.subr.mxu0 0.0
        %542 = vmatpush1.msra.mxu0 0.0
        %543 = vmatprep.subr.mxu0 0.0
        %544 = vmatpush1.msra.mxu0 0.0
        %545 = vmatprep.subr.mxu0 0.0
        %546 = vmatpush1.msra.mxu0 0.0
        %547 = vmatprep.subr.mxu0 0.0
        %548 = vmatpush1.msra.mxu0 %v340
        %549 = vmatprep.subr.mxu0 0.0
        %550 = vmatpush2.msra.mxu0 0.0
        %551 = vmatprep.subr.mxu0 0.0
        %552 = vmatpush2.msra.mxu0 0.0
        %553 = vmatprep.subr.mxu0 0.0
        %554 = vmatpush2.msra.mxu0 0.0
        %555 = vmatprep.subr.mxu0 0.0
        %556 = vmatpush2.msra.mxu0 0.0
        %557 = vmatprep.subr.mxu0 0.0
        %558 = vmatpush2.msra.mxu0 0.0
        %559 = vmatprep.subr.mxu0 0.0
        %560 = vmatpush2.msra.mxu0 0.0
        %561 = vmatprep.subr.mxu0 0.0
        %562 = vmatpush2.msra.mxu0 0.0
        %563 = vmatprep.subr.mxu0 0.0
        %564 = vmatpush2.msra.mxu0 0.0
        %565 = vmatprep.subr.mxu0 0.0
        %566 = vmatpush2.msra.mxu0 0.0
        %567 = vmatprep.subr.mxu0 0.0
        %568 = vmatpush2.msra.mxu0 0.0
        %569 = vmatprep.subr.mxu0 0.0
        %570 = vmatpush2.msra.mxu0 0.0
        %571 = vmatprep.subr.mxu0 0.0
        %572 = vmatpush2.msra.mxu0 0.0
        %573 = vmatprep.subr.mxu0 0.0
        %574 = vmatpush2.msra.mxu0 0.0
        %575 = vmatprep.subr.mxu0 0.0
        %576 = vmatpush2.msra.mxu0 0.0
        %577 = vmatprep.subr.mxu0 0.0
        %578 = vmatpush2.msra.mxu0 0.0
        %579 = vmatprep.subr.mxu0 0.0
        %580 = vmatpush2.msra.mxu0 0.0
        %581 = vmatprep.mubr.f32.mxu0 0.0
        %582 = vmatmul.mubr.f32.gmra.mxu0 %v506
        %v583 = vpop.f32.mrf.mxu0
        %v584 = vadd.f32 0.0, %v583
        %v585 = vpop.f32.mrf.mxu0
        %586 = vmatprep.mubr.f32.mxu0 0.0
        %587 = vmatmul.mubr.f32.gmra.mxu0 %v509
        %v588 = vpop.f32.mrf.mxu0
        %v589 = vadd.f32 0.0, %v588
        %v590 = vpop.f32.mrf.mxu0
        %591 = vmatprep.mubr.f32.mxu0 0.0
        %592 = vmatmul.mubr.f32.gmra.mxu0 %v512
        %v593 = vpop.f32.mrf.mxu0
        %v594 = vadd.f32 0.0, %v593
        %v595 = vpop.f32.mrf.mxu0
        %596 = vmatprep.mubr.f32.mxu0 0.0
        %597 = vmatmul.mubr.f32.gmra.mxu0 %v515
        %v598 = vpop.f32.mrf.mxu0
        %v599 = vadd.f32 0.0, %v598
        %v600 = vpop.f32.mrf.mxu0
        %601 = vdwg.mxu0
        %602 = vxpose.xlu0.b32.start [1/16] %v315, 128
        %603 = vxpose.xlu0.b32.cont [2/16] 0.0, 128
        %604 = vxpose.xlu0.b32.cont [3/16] 0.0, 128
        %605 = vxpose.xlu0.b32.cont [4/16] 0.0, 128
        %606 = vxpose.xlu0.b32.cont [5/16] 0.0, 128
        %607 = vxpose.xlu0.b32.cont [6/16] 0.0, 128
        %608 = vxpose.xlu0.b32.cont [7/16] 0.0, 128
        %609 = vxpose.xlu0.b32.cont [8/16] 0.0, 128
        %610 = vxpose.xlu0.b32.cont [9/16] 0.0, 128
        %611 = vxpose.xlu0.b32.cont [10/16] 0.0, 128
        %612 = vxpose.xlu0.b32.cont [11/16] 0.0, 128
        %613 = vxpose.xlu0.b32.cont [12/16] 0.0, 128
        %614 = vxpose.xlu0.b32.cont [13/16] 0.0, 128
        %615 = vxpose.xlu0.b32.cont [14/16] 0.0, 128
        %616 = vxpose.xlu0.b32.cont [15/16] 0.0, 128
        %617 = vxpose.xlu0.b32.end [16/16] 0.0, 128
        %v618 = vpop.trf.xlu0
        %v619 = vpop.trf.xlu0
        %v620 = vpop.trf.xlu0
        %v621 = vpop.trf.xlu0
        %v622 = vpop.trf.xlu0
        %v623 = vpop.trf.xlu0
        %v624 = vpop.trf.xlu0
        %v625 = vpop.trf.xlu0
        %v626 = vpop.trf.xlu0
        %v627 = vpop.trf.xlu0
        %v628 = vpop.trf.xlu0
        %v629 = vpop.trf.xlu0
        %v630 = vpop.trf.xlu0
        %v631 = vpop.trf.xlu0
        %v632 = vpop.trf.xlu0
        %v633 = vpop.trf.xlu0
        %v635 = vsel %vm375, %v618, 0
        %v638 = vsel %vm375, %v619, 0
        %v641 = vsel %vm375, %v620, 0
        %v644 = vsel %vm375, %v621, 0
        %646 = vmatprep.subr.mxu0 0.0
        %647 = vmatpush1.msra.mxu0 0.0
        %648 = vmatprep.subr.mxu0 0.0
        %649 = vmatpush1.msra.mxu0 0.0
        %650 = vmatprep.subr.mxu0 0.0
        %651 = vmatpush1.msra.mxu0 0.0
        %652 = vmatprep.subr.mxu0 0.0
        %653 = vmatpush1.msra.mxu0 0.0
        %654 = vmatprep.subr.mxu0 0.0
        %655 = vmatpush1.msra.mxu0 0.0
        %656 = vmatprep.subr.mxu0 0.0
        %657 = vmatpush1.msra.mxu0 0.0
        %658 = vmatprep.subr.mxu0 0.0
        %659 = vmatpush1.msra.mxu0 0.0
        %660 = vmatprep.subr.mxu0 0.0
        %661 = vmatpush1.msra.mxu0 0.0
        %662 = vmatprep.subr.mxu0 0.0
        %663 = vmatpush1.msra.mxu0 0.0
        %664 = vmatprep.subr.mxu0 0.0
        %665 = vmatpush1.msra.mxu0 0.0
        %666 = vmatprep.subr.mxu0 0.0
        %667 = vmatpush1.msra.mxu0 0.0
        %668 = vmatprep.subr.mxu0 0.0
        %669 = vmatpush1.msra.mxu0 0.0
        %670 = vmatprep.subr.mxu0 0.0
        %671 = vmatpush1.msra.mxu0 0.0
        %672 = vmatprep.subr.mxu0 0.0
        %673 = vmatpush1.msra.mxu0 0.0
        %674 = vmatprep.subr.mxu0 0.0
        %675 = vmatpush1.msra.mxu0 0.0
        %676 = vmatprep.subr.mxu0 0.0
        %677 = vmatpush1.msra.mxu0 %v341
        %678 = vmatprep.subr.mxu0 0.0
        %679 = vmatpush2.msra.mxu0 0.0
        %680 = vmatprep.subr.mxu0 0.0
        %681 = vmatpush2.msra.mxu0 0.0
        %682 = vmatprep.subr.mxu0 0.0
        %683 = vmatpush2.msra.mxu0 0.0
        %684 = vmatprep.subr.mxu0 0.0
        %685 = vmatpush2.msra.mxu0 0.0
        %686 = vmatprep.subr.mxu0 0.0
        %687 = vmatpush2.msra.mxu0 0.0
        %688 = vmatprep.subr.mxu0 0.0
        %689 = vmatpush2.msra.mxu0 0.0
        %690 = vmatprep.subr.mxu0 0.0
        %691 = vmatpush2.msra.mxu0 0.0
        %692 = vmatprep.subr.mxu0 0.0
        %693 = vmatpush2.msra.mxu0 0.0
        %694 = vmatprep.subr.mxu0 0.0
        %695 = vmatpush2.msra.mxu0 0.0
        %696 = vmatprep.subr.mxu0 0.0
        %697 = vmatpush2.msra.mxu0 0.0
        %698 = vmatprep.subr.mxu0 0.0
        %699 = vmatpush2.msra.mxu0 0.0
        %700 = vmatprep.subr.mxu0 0.0
        %701 = vmatpush2.msra.mxu0 0.0
        %702 = vmatprep.subr.mxu0 0.0
        %703 = vmatpush2.msra.mxu0 0.0
        %704 = vmatprep.subr.mxu0 0.0
        %705 = vmatpush2.msra.mxu0 0.0
        %706 = vmatprep.subr.mxu0 0.0
        %707 = vmatpush2.msra.mxu0 0.0
        %708 = vmatprep.subr.mxu0 0.0
        %709 = vmatpush2.msra.mxu0 0.0
        %710 = vmatprep.mubr.f32.mxu0 0.0
        %711 = vmatmul.mubr.f32.gmra.mxu0 %v635
        %v712 = vpop.f32.mrf.mxu0
        %v713 = vadd.f32 0.0, %v712
        %v714 = vpop.f32.mrf.mxu0
        %715 = vmatprep.mubr.f32.mxu0 0.0
        %716 = vmatmul.mubr.f32.gmra.mxu0 %v638
        %v717 = vpop.f32.mrf.mxu0
        %v718 = vadd.f32 0.0, %v717
        %v719 = vpop.f32.mrf.mxu0
        %720 = vmatprep.mubr.f32.mxu0 0.0
        %721 = vmatmul.mubr.f32.gmra.mxu0 %v641
        %v722 = vpop.f32.mrf.mxu0
        %v723 = vadd.f32 0.0, %v722
        %v724 = vpop.f32.mrf.mxu0
        %725 = vmatprep.mubr.f32.mxu0 0.0
        %726 = vmatmul.mubr.f32.gmra.mxu0 %v644
        %v727 = vpop.f32.mrf.mxu0
        %v728 = vadd.f32 0.0, %v727
        %v729 = vpop.f32.mrf.mxu0
        %730 = vdwg.mxu0
        %731 = vxpose.xlu0.b32.start [1/16] %v316, 128
        %732 = vxpose.xlu0.b32.cont [2/16] 0.0, 128
        %733 = vxpose.xlu0.b32.cont [3/16] 0.0, 128
        %734 = vxpose.xlu0.b32.cont [4/16] 0.0, 128
        %735 = vxpose.xlu0.b32.cont [5/16] 0.0, 128
        %736 = vxpose.xlu0.b32.cont [6/16] 0.0, 128
        %737 = vxpose.xlu0.b32.cont [7/16] 0.0, 128
        %738 = vxpose.xlu0.b32.cont [8/16] 0.0, 128
        %739 = vxpose.xlu0.b32.cont [9/16] 0.0, 128
        %740 = vxpose.xlu0.b32.cont [10/16] 0.0, 128
        %741 = vxpose.xlu0.b32.cont [11/16] 0.0, 128
        %742 = vxpose.xlu0.b32.cont [12/16] 0.0, 128
        %743 = vxpose.xlu0.b32.cont [13/16] 0.0, 128
        %744 = vxpose.xlu0.b32.cont [14/16] 0.0, 128
        %745 = vxpose.xlu0.b32.cont [15/16] 0.0, 128
        %746 = vxpose.xlu0.b32.end [16/16] 0.0, 128
        %v747 = vpop.trf.xlu0
        %v748 = vpop.trf.xlu0
        %v749 = vpop.trf.xlu0
        %v750 = vpop.trf.xlu0
        %v751 = vpop.trf.xlu0
        %v752 = vpop.trf.xlu0
        %v753 = vpop.trf.xlu0
        %v754 = vpop.trf.xlu0
        %v755 = vpop.trf.xlu0
        %v756 = vpop.trf.xlu0
        %v757 = vpop.trf.xlu0
        %v758 = vpop.trf.xlu0
        %v759 = vpop.trf.xlu0
        %v760 = vpop.trf.xlu0
        %v761 = vpop.trf.xlu0
        %v762 = vpop.trf.xlu0
        %v764 = vsel %vm375, %v747, 0
        %v767 = vsel %vm375, %v748, 0
        %v770 = vsel %vm375, %v749, 0
        %v773 = vsel %vm375, %v750, 0
        %775 = vmatprep.subr.mxu0 0.0
        %776 = vmatpush1.msra.mxu0 0.0
        %777 = vmatprep.subr.mxu0 0.0
        %778 = vmatpush1.msra.mxu0 0.0
        %779 = vmatprep.subr.mxu0 0.0
        %780 = vmatpush1.msra.mxu0 0.0
        %781 = vmatprep.subr.mxu0 0.0
        %782 = vmatpush1.msra.mxu0 0.0
        %783 = vmatprep.subr.mxu0 0.0
        %784 = vmatpush1.msra.mxu0 0.0
        %785 = vmatprep.subr.mxu0 0.0
        %786 = vmatpush1.msra.mxu0 0.0
        %787 = vmatprep.subr.mxu0 0.0
        %788 = vmatpush1.msra.mxu0 0.0
        %789 = vmatprep.subr.mxu0 0.0
        %790 = vmatpush1.msra.mxu0 0.0
        %791 = vmatprep.subr.mxu0 0.0
        %792 = vmatpush1.msra.mxu0 0.0
        %793 = vmatprep.subr.mxu0 0.0
        %794 = vmatpush1.msra.mxu0 0.0
        %795 = vmatprep.subr.mxu0 0.0
        %796 = vmatpush1.msra.mxu0 0.0
        %797 = vmatprep.subr.mxu0 0.0
        %798 = vmatpush1.msra.mxu0 0.0
        %799 = vmatprep.subr.mxu0 0.0
        %800 = vmatpush1.msra.mxu0 0.0
        %801 = vmatprep.subr.mxu0 0.0
        %802 = vmatpush1.msra.mxu0 0.0
        %803 = vmatprep.subr.mxu0 0.0
        %804 = vmatpush1.msra.mxu0 0.0
        %805 = vmatprep.subr.mxu0 0.0
        %806 = vmatpush1.msra.mxu0 %v342
        %807 = vmatprep.subr.mxu0 0.0
        %808 = vmatpush2.msra.mxu0 0.0
        %809 = vmatprep.subr.mxu0 0.0
        %810 = vmatpush2.msra.mxu0 0.0
        %811 = vmatprep.subr.mxu0 0.0
        %812 = vmatpush2.msra.mxu0 0.0
        %813 = vmatprep.subr.mxu0 0.0
        %814 = vmatpush2.msra.mxu0 0.0
        %815 = vmatprep.subr.mxu0 0.0
        %816 = vmatpush2.msra.mxu0 0.0
        %817 = vmatprep.subr.mxu0 0.0
        %818 = vmatpush2.msra.mxu0 0.0
        %819 = vmatprep.subr.mxu0 0.0
        %820 = vmatpush2.msra.mxu0 0.0
        %821 = vmatprep.subr.mxu0 0.0
        %822 = vmatpush2.msra.mxu0 0.0
        %823 = vmatprep.subr.mxu0 0.0
        %824 = vmatpush2.msra.mxu0 0.0
        %825 = vmatprep.subr.mxu0 0.0
        %826 = vmatpush2.msra.mxu0 0.0
        %827 = vmatprep.subr.mxu0 0.0
        %828 = vmatpush2.msra.mxu0 0.0
        %829 = vmatprep.subr.mxu0 0.0
        %830 = vmatpush2.msra.mxu0 0.0
        %831 = vmatprep.subr.mxu0 0.0
        %832 = vmatpush2.msra.mxu0 0.0
        %833 = vmatprep.subr.mxu0 0.0
        %834 = vmatpush2.msra.mxu0 0.0
        %835 = vmatprep.subr.mxu0 0.0
        %836 = vmatpush2.msra.mxu0 0.0
        %837 = vmatprep.subr.mxu0 0.0
        %838 = vmatpush2.msra.mxu0 0.0
        %839 = vmatprep.mubr.f32.mxu0 0.0
        %840 = vmatmul.mubr.f32.gmra.mxu0 %v764
        %v841 = vpop.f32.mrf.mxu0
        %v842 = vadd.f32 0.0, %v841
        %v843 = vpop.f32.mrf.mxu0
        %844 = vmatprep.mubr.f32.mxu0 0.0
        %845 = vmatmul.mubr.f32.gmra.mxu0 %v767
        %v846 = vpop.f32.mrf.mxu0
        %v847 = vadd.f32 0.0, %v846
        %v848 = vpop.f32.mrf.mxu0
        %849 = vmatprep.mubr.f32.mxu0 0.0
        %850 = vmatmul.mubr.f32.gmra.mxu0 %v770
        %v851 = vpop.f32.mrf.mxu0
        %v852 = vadd.f32 0.0, %v851
        %v853 = vpop.f32.mrf.mxu0
        %854 = vmatprep.mubr.f32.mxu0 0.0
        %855 = vmatmul.mubr.f32.gmra.mxu0 %v773
        %v856 = vpop.f32.mrf.mxu0
        %v857 = vadd.f32 0.0, %v856
        %v858 = vpop.f32.mrf.mxu0
        %859 = vdwg.mxu0
        %v860 = vrot.slane %v339, 4
        %v861 = vadd.f32 %v339, %v860
        %v862 = vrot.slane %v861, 2
        %v863 = vadd.f32 %v861, %v862
        %v864 = vrot.slane %v863, 1
        %v865 = vadd.f32 %v863, %v864
        %v866 = vrot.slane %v340, 4
        %v867 = vadd.f32 %v340, %v866
        %v868 = vrot.slane %v867, 2
        %v869 = vadd.f32 %v867, %v868
        %v870 = vrot.slane %v869, 1
        %v871 = vadd.f32 %v869, %v870
        %v872 = vrot.slane %v341, 4
        %v873 = vadd.f32 %v341, %v872
        %v874 = vrot.slane %v873, 2
        %v875 = vadd.f32 %v873, %v874
        %v876 = vrot.slane %v875, 1
        %v877 = vadd.f32 %v875, %v876
        %v878 = vrot.slane %v342, 4
        %v879 = vadd.f32 %v342, %v878
        %v880 = vrot.slane %v879, 2
        %v881 = vadd.f32 %v879, %v880
        %v882 = vrot.slane %v881, 1
        %v883 = vadd.f32 %v881, %v882
        %v884 = vmax.f32 %v865, 1.0
        %v885 = vmax.f32 %v871, 1.0
        %v886 = vmax.f32 %v877, 1.0
        %v887 = vmax.f32 %v883, 1.0
        %v888 = vrcp.pop %v884
        %v889 = vrcp.pop %v885
        %v890 = vrcp.pop %v886
        %v891 = vrcp.pop %v887
        %v892 = vld [vmem:[%s297] sm:$0xff]
        %v893 = vld [vmem:[%s297 + $0x8] sm:$0xff]
        %v894 = vld [vmem:[%s297 + $0x10] sm:$0xff]
        %v895 = vld [vmem:[%s297 + $0x18] sm:$0xff]
        %vm896 = vcmask 261120
        %v898 = vsel %vm896, %v892, 0
        %900 = vmatprep.subr.mxu0 0.0
        %901 = vmatpush1.msra.mxu0 0.0
        %902 = vmatprep.subr.mxu0 0.0
        %903 = vmatpush1.msra.mxu0 0.0
        %904 = vmatprep.subr.mxu0 0.0
        %905 = vmatpush1.msra.mxu0 0.0
        %906 = vmatprep.subr.mxu0 0.0
        %907 = vmatpush1.msra.mxu0 0.0
        %908 = vmatprep.subr.mxu0 0.0
        %909 = vmatpush1.msra.mxu0 0.0
        %910 = vmatprep.subr.mxu0 0.0
        %911 = vmatpush1.msra.mxu0 0.0
        %912 = vmatprep.subr.mxu0 0.0
        %913 = vmatpush1.msra.mxu0 0.0
        %914 = vmatprep.subr.mxu0 0.0
        %915 = vmatpush1.msra.mxu0 0.0
        %916 = vmatprep.subr.mxu0 0.0
        %917 = vmatpush1.msra.mxu0 0.0
        %918 = vmatprep.subr.mxu0 0.0
        %919 = vmatpush1.msra.mxu0 0.0
        %920 = vmatprep.subr.mxu0 0.0
        %921 = vmatpush1.msra.mxu0 0.0
        %922 = vmatprep.subr.mxu0 0.0
        %923 = vmatpush1.msra.mxu0 0.0
        %924 = vmatprep.subr.mxu0 0.0
        %925 = vmatpush1.msra.mxu0 %v470
        %926 = vmatprep.subr.mxu0 0.0
        %927 = vmatpush1.msra.mxu0 %v465
        %928 = vmatprep.subr.mxu0 0.0
        %929 = vmatpush1.msra.mxu0 %v460
        %930 = vmatprep.subr.mxu0 0.0
        %931 = vmatpush1.msra.mxu0 %v455
        %932 = vmatprep.subr.mxu0 0.0
        %933 = vmatpush2.msra.mxu0 0.0
        %934 = vmatprep.subr.mxu0 0.0
        %935 = vmatpush2.msra.mxu0 0.0
        %936 = vmatprep.subr.mxu0 0.0
        %937 = vmatpush2.msra.mxu0 0.0
        %938 = vmatprep.subr.mxu0 0.0
        %939 = vmatpush2.msra.mxu0 0.0
        %940 = vmatprep.subr.mxu0 0.0
        %941 = vmatpush2.msra.mxu0 0.0
        %942 = vmatprep.subr.mxu0 0.0
        %943 = vmatpush2.msra.mxu0 0.0
        %944 = vmatprep.subr.mxu0 0.0
        %945 = vmatpush2.msra.mxu0 0.0
        %946 = vmatprep.subr.mxu0 0.0
        %947 = vmatpush2.msra.mxu0 0.0
        %948 = vmatprep.subr.mxu0 0.0
        %949 = vmatpush2.msra.mxu0 0.0
        %950 = vmatprep.subr.mxu0 0.0
        %951 = vmatpush2.msra.mxu0 0.0
        %952 = vmatprep.subr.mxu0 0.0
        %953 = vmatpush2.msra.mxu0 0.0
        %954 = vmatprep.subr.mxu0 0.0
        %955 = vmatpush2.msra.mxu0 0.0
        %956 = vmatprep.subr.mxu0 0.0
        %957 = vmatpush2.msra.mxu0 0.0
        %958 = vmatprep.subr.mxu0 0.0
        %959 = vmatpush2.msra.mxu0 0.0
        %960 = vmatprep.subr.mxu0 0.0
        %961 = vmatpush2.msra.mxu0 0.0
        %962 = vmatprep.subr.mxu0 0.0
        %963 = vmatpush2.msra.mxu0 0.0
        %964 = vmatprep.mubr.f32.mxu0 0.0
        %965 = vmatmul.mubr.f32.gmra.mxu0 %v898
        %v966 = vpop.f32.mrf.mxu0
        %v967 = vadd.f32 0.0, %v966
        %v968 = vpop.f32.mrf.mxu0
        %969 = vdwg.mxu0
        %v971 = vsel %vm896, %v893, 0
        %973 = vmatprep.subr.mxu0 0.0
        %974 = vmatpush1.msra.mxu0 0.0
        %975 = vmatprep.subr.mxu0 0.0
        %976 = vmatpush1.msra.mxu0 0.0
        %977 = vmatprep.subr.mxu0 0.0
        %978 = vmatpush1.msra.mxu0 0.0
        %979 = vmatprep.subr.mxu0 0.0
        %980 = vmatpush1.msra.mxu0 0.0
        %981 = vmatprep.subr.mxu0 0.0
        %982 = vmatpush1.msra.mxu0 0.0
        %983 = vmatprep.subr.mxu0 0.0
        %984 = vmatpush1.msra.mxu0 0.0
        %985 = vmatprep.subr.mxu0 0.0
        %986 = vmatpush1.msra.mxu0 0.0
        %987 = vmatprep.subr.mxu0 0.0
        %988 = vmatpush1.msra.mxu0 0.0
        %989 = vmatprep.subr.mxu0 0.0
        %990 = vmatpush1.msra.mxu0 0.0
        %991 = vmatprep.subr.mxu0 0.0
        %992 = vmatpush1.msra.mxu0 0.0
        %993 = vmatprep.subr.mxu0 0.0
        %994 = vmatpush1.msra.mxu0 0.0
        %995 = vmatprep.subr.mxu0 0.0
        %996 = vmatpush1.msra.mxu0 0.0
        %997 = vmatprep.subr.mxu0 0.0
        %998 = vmatpush1.msra.mxu0 %v599
        %999 = vmatprep.subr.mxu0 0.0
        %1000 = vmatpush1.msra.mxu0 %v594
        %1001 = vmatprep.subr.mxu0 0.0
        %1002 = vmatpush1.msra.mxu0 %v589
        %1003 = vmatprep.subr.mxu0 0.0
        %1004 = vmatpush1.msra.mxu0 %v584
        %1005 = vmatprep.subr.mxu0 0.0
        %1006 = vmatpush2.msra.mxu0 0.0
        %1007 = vmatprep.subr.mxu0 0.0
        %1008 = vmatpush2.msra.mxu0 0.0
        %1009 = vmatprep.subr.mxu0 0.0
        %1010 = vmatpush2.msra.mxu0 0.0
        %1011 = vmatprep.subr.mxu0 0.0
        %1012 = vmatpush2.msra.mxu0 0.0
        %1013 = vmatprep.subr.mxu0 0.0
        %1014 = vmatpush2.msra.mxu0 0.0
        %1015 = vmatprep.subr.mxu0 0.0
        %1016 = vmatpush2.msra.mxu0 0.0
        %1017 = vmatprep.subr.mxu0 0.0
        %1018 = vmatpush2.msra.mxu0 0.0
        %1019 = vmatprep.subr.mxu0 0.0
        %1020 = vmatpush2.msra.mxu0 0.0
        %1021 = vmatprep.subr.mxu0 0.0
        %1022 = vmatpush2.msra.mxu0 0.0
        %1023 = vmatprep.subr.mxu0 0.0
        %1024 = vmatpush2.msra.mxu0 0.0
        %1025 = vmatprep.subr.mxu0 0.0
        %1026 = vmatpush2.msra.mxu0 0.0
        %1027 = vmatprep.subr.mxu0 0.0
        %1028 = vmatpush2.msra.mxu0 0.0
        %1029 = vmatprep.subr.mxu0 0.0
        %1030 = vmatpush2.msra.mxu0 0.0
        %1031 = vmatprep.subr.mxu0 0.0
        %1032 = vmatpush2.msra.mxu0 0.0
        %1033 = vmatprep.subr.mxu0 0.0
        %1034 = vmatpush2.msra.mxu0 0.0
        %1035 = vmatprep.subr.mxu0 0.0
        %1036 = vmatpush2.msra.mxu0 0.0
        %1037 = vmatprep.mubr.f32.mxu0 0.0
        %1038 = vmatmul.mubr.f32.gmra.mxu0 %v971
        %v1039 = vpop.f32.mrf.mxu0
        %v1040 = vadd.f32 0.0, %v1039
        %v1041 = vpop.f32.mrf.mxu0
        %1042 = vdwg.mxu0
        %v1044 = vsel %vm896, %v894, 0
        %1046 = vmatprep.subr.mxu0 0.0
        %1047 = vmatpush1.msra.mxu0 0.0
        %1048 = vmatprep.subr.mxu0 0.0
        %1049 = vmatpush1.msra.mxu0 0.0
        %1050 = vmatprep.subr.mxu0 0.0
        %1051 = vmatpush1.msra.mxu0 0.0
        %1052 = vmatprep.subr.mxu0 0.0
        %1053 = vmatpush1.msra.mxu0 0.0
        %1054 = vmatprep.subr.mxu0 0.0
        %1055 = vmatpush1.msra.mxu0 0.0
        %1056 = vmatprep.subr.mxu0 0.0
        %1057 = vmatpush1.msra.mxu0 0.0
        %1058 = vmatprep.subr.mxu0 0.0
        %1059 = vmatpush1.msra.mxu0 0.0
        %1060 = vmatprep.subr.mxu0 0.0
        %1061 = vmatpush1.msra.mxu0 0.0
        %1062 = vmatprep.subr.mxu0 0.0
        %1063 = vmatpush1.msra.mxu0 0.0
        %1064 = vmatprep.subr.mxu0 0.0
        %1065 = vmatpush1.msra.mxu0 0.0
        %1066 = vmatprep.subr.mxu0 0.0
        %1067 = vmatpush1.msra.mxu0 0.0
        %1068 = vmatprep.subr.mxu0 0.0
        %1069 = vmatpush1.msra.mxu0 0.0
        %1070 = vmatprep.subr.mxu0 0.0
        %1071 = vmatpush1.msra.mxu0 %v728
        %1072 = vmatprep.subr.mxu0 0.0
        %1073 = vmatpush1.msra.mxu0 %v723
        %1074 = vmatprep.subr.mxu0 0.0
        %1075 = vmatpush1.msra.mxu0 %v718
        %1076 = vmatprep.subr.mxu0 0.0
        %1077 = vmatpush1.msra.mxu0 %v713
        %1078 = vmatprep.subr.mxu0 0.0
        %1079 = vmatpush2.msra.mxu0 0.0
        %1080 = vmatprep.subr.mxu0 0.0
        %1081 = vmatpush2.msra.mxu0 0.0
        %1082 = vmatprep.subr.mxu0 0.0
        %1083 = vmatpush2.msra.mxu0 0.0
        %1084 = vmatprep.subr.mxu0 0.0
        %1085 = vmatpush2.msra.mxu0 0.0
        %1086 = vmatprep.subr.mxu0 0.0
        %1087 = vmatpush2.msra.mxu0 0.0
        %1088 = vmatprep.subr.mxu0 0.0
        %1089 = vmatpush2.msra.mxu0 0.0
        %1090 = vmatprep.subr.mxu0 0.0
        %1091 = vmatpush2.msra.mxu0 0.0
        %1092 = vmatprep.subr.mxu0 0.0
        %1093 = vmatpush2.msra.mxu0 0.0
        %1094 = vmatprep.subr.mxu0 0.0
        %1095 = vmatpush2.msra.mxu0 0.0
        %1096 = vmatprep.subr.mxu0 0.0
        %1097 = vmatpush2.msra.mxu0 0.0
        %1098 = vmatprep.subr.mxu0 0.0
        %1099 = vmatpush2.msra.mxu0 0.0
        %1100 = vmatprep.subr.mxu0 0.0
        %1101 = vmatpush2.msra.mxu0 0.0
        %1102 = vmatprep.subr.mxu0 0.0
        %1103 = vmatpush2.msra.mxu0 0.0
        %1104 = vmatprep.subr.mxu0 0.0
        %1105 = vmatpush2.msra.mxu0 0.0
        %1106 = vmatprep.subr.mxu0 0.0
        %1107 = vmatpush2.msra.mxu0 0.0
        %1108 = vmatprep.subr.mxu0 0.0
        %1109 = vmatpush2.msra.mxu0 0.0
        %1110 = vmatprep.mubr.f32.mxu0 0.0
        %1111 = vmatmul.mubr.f32.gmra.mxu0 %v1044
        %v1112 = vpop.f32.mrf.mxu0
        %v1113 = vadd.f32 0.0, %v1112
        %v1114 = vpop.f32.mrf.mxu0
        %1115 = vdwg.mxu0
        %v1117 = vsel %vm896, %v895, 0
        %1119 = vmatprep.subr.mxu0 0.0
        %1120 = vmatpush1.msra.mxu0 0.0
        %1121 = vmatprep.subr.mxu0 0.0
        %1122 = vmatpush1.msra.mxu0 0.0
        %1123 = vmatprep.subr.mxu0 0.0
        %1124 = vmatpush1.msra.mxu0 0.0
        %1125 = vmatprep.subr.mxu0 0.0
        %1126 = vmatpush1.msra.mxu0 0.0
        %1127 = vmatprep.subr.mxu0 0.0
        %1128 = vmatpush1.msra.mxu0 0.0
        %1129 = vmatprep.subr.mxu0 0.0
        %1130 = vmatpush1.msra.mxu0 0.0
        %1131 = vmatprep.subr.mxu0 0.0
        %1132 = vmatpush1.msra.mxu0 0.0
        %1133 = vmatprep.subr.mxu0 0.0
        %1134 = vmatpush1.msra.mxu0 0.0
        %1135 = vmatprep.subr.mxu0 0.0
        %1136 = vmatpush1.msra.mxu0 0.0
        %1137 = vmatprep.subr.mxu0 0.0
        %1138 = vmatpush1.msra.mxu0 0.0
        %1139 = vmatprep.subr.mxu0 0.0
        %1140 = vmatpush1.msra.mxu0 0.0
        %1141 = vmatprep.subr.mxu0 0.0
        %1142 = vmatpush1.msra.mxu0 0.0
        %1143 = vmatprep.subr.mxu0 0.0
        %1144 = vmatpush1.msra.mxu0 %v857
        %1145 = vmatprep.subr.mxu0 0.0
        %1146 = vmatpush1.msra.mxu0 %v852
        %1147 = vmatprep.subr.mxu0 0.0
        %1148 = vmatpush1.msra.mxu0 %v847
        %1149 = vmatprep.subr.mxu0 0.0
        %1150 = vmatpush1.msra.mxu0 %v842
        %1151 = vmatprep.subr.mxu0 0.0
        %1152 = vmatpush2.msra.mxu0 0.0
        %1153 = vmatprep.subr.mxu0 0.0
        %1154 = vmatpush2.msra.mxu0 0.0
        %1155 = vmatprep.subr.mxu0 0.0
        %1156 = vmatpush2.msra.mxu0 0.0
        %1157 = vmatprep.subr.mxu0 0.0
        %1158 = vmatpush2.msra.mxu0 0.0
        %1159 = vmatprep.subr.mxu0 0.0
        %1160 = vmatpush2.msra.mxu0 0.0
        %1161 = vmatprep.subr.mxu0 0.0
        %1162 = vmatpush2.msra.mxu0 0.0
        %1163 = vmatprep.subr.mxu0 0.0
        %1164 = vmatpush2.msra.mxu0 0.0
        %1165 = vmatprep.subr.mxu0 0.0
        %1166 = vmatpush2.msra.mxu0 0.0
        %1167 = vmatprep.subr.mxu0 0.0
        %1168 = vmatpush2.msra.mxu0 0.0
        %1169 = vmatprep.subr.mxu0 0.0
        %1170 = vmatpush2.msra.mxu0 0.0
        %1171 = vmatprep.subr.mxu0 0.0
        %1172 = vmatpush2.msra.mxu0 0.0
        %1173 = vmatprep.subr.mxu0 0.0
        %1174 = vmatpush2.msra.mxu0 0.0
        %1175 = vmatprep.subr.mxu0 0.0
        %1176 = vmatpush2.msra.mxu0 0.0
        %1177 = vmatprep.subr.mxu0 0.0
        %1178 = vmatpush2.msra.mxu0 0.0
        %1179 = vmatprep.subr.mxu0 0.0
        %1180 = vmatpush2.msra.mxu0 0.0
        %1181 = vmatprep.subr.mxu0 0.0
        %1182 = vmatpush2.msra.mxu0 0.0
        %1183 = vmatprep.mubr.f32.mxu0 0.0
        %1184 = vmatmul.mubr.f32.gmra.mxu0 %v1117
        %v1185 = vpop.f32.mrf.mxu0
        %v1186 = vadd.f32 0.0, %v1185
        %v1187 = vpop.f32.mrf.mxu0
        %1188 = vdwg.mxu0
        %v1189 = vmul.f32 %v892, %v892
        %v1190 = vmul.f32 %v893, %v893
        %v1191 = vmul.f32 %v894, %v894
        %v1192 = vmul.f32 %v895, %v895
        %v1193 = vsel %vm896, %v1189, 0.0
        %1194 = vadd.xlane.f32.xlu0 %v1193
        %v1195 = vpop.xlane.xlu0 %1194
        %v1196 = vsel %vm896, %v1190, 0.0
        %1197 = vadd.xlane.f32.xlu0 %v1196
        %v1198 = vpop.xlane.xlu0 %1197
        %v1199 = vsel %vm896, %v1191, 0.0
        %1200 = vadd.xlane.f32.xlu0 %v1199
        %v1201 = vpop.xlane.xlu0 %1200
        %v1202 = vsel %vm896, %v1192, 0.0
        %1203 = vadd.xlane.f32.xlu0 %v1202
        %v1204 = vpop.xlane.xlu0 %1203
        %v1205 = vmul.f32 %v455, %v455
        %v1206 = vmul.f32 %v460, %v460
        %v1207 = vmul.f32 %v465, %v465
        %v1208 = vmul.f32 %v470, %v470
        %v1209 = vmul.f32 %v584, %v584
        %v1210 = vmul.f32 %v589, %v589
        %v1211 = vmul.f32 %v594, %v594
        %v1212 = vmul.f32 %v599, %v599
        %v1213 = vmul.f32 %v713, %v713
        %v1214 = vmul.f32 %v718, %v718
        %v1215 = vmul.f32 %v723, %v723
        %v1216 = vmul.f32 %v728, %v728
        %v1217 = vmul.f32 %v842, %v842
        %v1218 = vmul.f32 %v847, %v847
        %v1219 = vmul.f32 %v852, %v852
        %v1220 = vmul.f32 %v857, %v857
        %v1221 = vadd.f32 %v1205, %v1206
        %v1222 = vadd.f32 %v1221, %v1207
        %v1223 = vadd.f32 %v1222, %v1208
        %v1224 = vrot.slane %v1223, 4
        %v1225 = vadd.f32 %v1223, %v1224
        %v1226 = vrot.slane %v1225, 2
        %v1227 = vadd.f32 %v1225, %v1226
        %v1228 = vrot.slane %v1227, 1
        %v1229 = vadd.f32 %v1227, %v1228
        %v1230 = vadd.f32 %v1209, %v1210
        %v1231 = vadd.f32 %v1230, %v1211
        %v1232 = vadd.f32 %v1231, %v1212
        %v1233 = vrot.slane %v1232, 4
        %v1234 = vadd.f32 %v1232, %v1233
        %v1235 = vrot.slane %v1234, 2
        %v1236 = vadd.f32 %v1234, %v1235
        %v1237 = vrot.slane %v1236, 1
        %v1238 = vadd.f32 %v1236, %v1237
        %v1239 = vadd.f32 %v1213, %v1214
        %v1240 = vadd.f32 %v1239, %v1215
        %v1241 = vadd.f32 %v1240, %v1216
        %v1242 = vrot.slane %v1241, 4
        %v1243 = vadd.f32 %v1241, %v1242
        %v1244 = vrot.slane %v1243, 2
        %v1245 = vadd.f32 %v1243, %v1244
        %v1246 = vrot.slane %v1245, 1
        %v1247 = vadd.f32 %v1245, %v1246
        %v1248 = vadd.f32 %v1217, %v1218
        %v1249 = vadd.f32 %v1248, %v1219
        %v1250 = vadd.f32 %v1249, %v1220
        %v1251 = vrot.slane %v1250, 4
        %v1252 = vadd.f32 %v1250, %v1251
        %v1253 = vrot.slane %v1252, 2
        %v1254 = vadd.f32 %v1252, %v1253
        %v1255 = vrot.slane %v1254, 1
        %v1256 = vadd.f32 %v1254, %v1255
        %s1257 = sld [smem:[#allocation2]]
        %v1258 = vmul.f32 %v967, %v888
        %v1259 = vmul.f32 %v1040, %v889
        %v1260 = vmul.f32 %v1113, %v890
        %v1261 = vmul.f32 %v1186, %v891
        %v1262 = vmul.f32 %v1258, 2.0
        %v1263 = vmul.f32 %v1259, 2.0
        %v1264 = vmul.f32 %v1260, 2.0
        %v1265 = vmul.f32 %v1261, 2.0
        %v1266 = vsub.f32 %v1195, %v1262
        %v1267 = vsub.f32 %v1198, %v1263
        %v1268 = vsub.f32 %v1201, %v1264
        %v1269 = vsub.f32 %v1204, %v1265
        %v1270 = vmul.f32 %v888, %v888
        %v1271 = vmul.f32 %v889, %v889
        %v1272 = vmul.f32 %v890, %v890
        %v1273 = vmul.f32 %v891, %v891
        %v1274 = vmul.f32 %v1229, %v1270
        %v1275 = vmul.f32 %v1238, %v1271
        %v1276 = vmul.f32 %v1247, %v1272
        %v1277 = vmul.f32 %v1256, %v1273
        %v1278 = vadd.f32 %v1266, %v1274
        %v1279 = vadd.f32 %v1267, %v1275
        %v1280 = vadd.f32 %v1268, %v1276
        %v1281 = vadd.f32 %v1269, %v1277
        %v1282 = vsub.f32 0.0, %v1278
        %v1283 = vsub.f32 0.0, %v1279
        %v1284 = vsub.f32 0.0, %v1280
        %v1285 = vsub.f32 0.0, %v1281
        %v1286 = vstv %s1257
        %v1287 = vmul.f32 %v1282, %v1286
        %v1288 = vmul.f32 %v1283, %v1286
        %v1289 = vmul.f32 %v1284, %v1286
        %v1290 = vmul.f32 %v1285, %v1286
        %vm1291 = vcmask 31744
        %1292 = vst.msk [vmem:[%s274] sm:$0xff] %vm1291, %v1287
        %1293 = vst.msk [vmem:[%s274 + $0x8] sm:$0xff] %vm1291, %v1288
        %1294 = vst.msk [vmem:[%s274 + $0x10] sm:$0xff] %vm1291, %v1289
        %1295 = vst.msk [vmem:[%s274 + $0x18] sm:$0xff] %vm1291, %v1290
        %s1296 = sand.u32 %s126, 1
        %s1297 = sand.u32 %s126, 1
        %s1298 = smul.addr %s1297, 32
        %s1299 = scalar_lea.vmem [#allocation5], %s1298
        // Predicated region
        $region41: #{tpu_custom_call.1} parent=35 // pred_check
          %p1300 = pneg %p136
        $region42: #{tpu_custom_call.1} parent=35 // pred_check_branch
          %1302 = sbr.rel (%p1300) target = $region44
        $region43: #{tpu_custom_call.1} parent=35 // pred_region
          %s1303 = smul.u32 4, %s19
          %s1304 = ssub.s32 7, %s1303
          %p1305 = scmp.lt.s32.totalorder %s1304, 4
          %s1306 = scalar_select %p1305, %s1304, 4
          %s1307 = smul.u32 128, %s1306
          %p1308 = scmp.ne.s32.totalorder 0, %s1307
          %s1309 = smul.addr %s1303, 8
          %s1310 = scalar_lea.vmem %s4, %s1309
          // Predicated region
          $region45: #{tpu_custom_call.1} parent=43 // pred_check
            %p1311 = pneg %p1308
          $region46: #{tpu_custom_call.1} parent=43 // pred_check_branch
            %1313 = sbr.rel (%p1311) target = $region48
          $region47: #{tpu_custom_call.1} parent=43 // pred_region
            // Predicated region
            $region49: #{tpu_custom_call.1} parent=47 // pred_check
              _
            $region50: #{tpu_custom_call.1} parent=47 // pred_check_branch
              %1315 = sbr.rel (0) target = $region52
            $region51: #{tpu_custom_call.1} parent=47 // pred_region
              // Predicated region
              $region71: #{tpu_custom_call.1} parent=51 // pred_check
                _
              $region72: #{tpu_custom_call.1} parent=51 // pred_check_branch
                %1371 = sbr.rel (0) target = $region74
              $region73: #{tpu_custom_call.1} parent=51 // pred_region
                %s1372 = sshrl.u32 %s1306, 2
                // While loop
                $region75: #{tpu_custom_call.1} parent=73 // loop_pre_header
                  _
                $region76: #{tpu_custom_call.1} parent=73 // loop_header
                  %s1374 = sphi 0, %s1376
                  %p1375 = scmp.ge.s32.totalorder %s1374, %s1372
                  %s1379 = sphi 0, %s1392
                  %s1380 = sphi %s1299, %s1395
                  %s1381 = sphi %s1310, %s1396
                $region77: #{tpu_custom_call.1} parent=73 // loop_header_branch
                  %1378 = sbr.rel (%p1375) target = $region81
                $region78: #{tpu_custom_call.1} parent=73 // loop_body
                  %v1382 = vld [vmem:[%s1380] sm:$0xff]
                  %1383 = vst [vmem:[%s1381] sm:$0xff] %v1382
                  %v1384 = vld [vmem:[%s1380 + $0x8] sm:$0xff]
                  %1385 = vst [vmem:[%s1381 + $0x8] sm:$0xff] %v1384
                  %v1386 = vld [vmem:[%s1380 + $0x10] sm:$0xff]
                  %1387 = vst [vmem:[%s1381 + $0x10] sm:$0xff] %v1386
                  %v1388 = vld [vmem:[%s1380 + $0x18] sm:$0xff]
                  %1389 = vst [vmem:[%s1381 + $0x18] sm:$0xff] %v1388
                  %s1390 = sadd.s32 1, %s1379
                  %p1391 = scmp.ge.s32.totalorder %s1390, %s1372
                  %s1392 = scalar_select %p1391, 0, %s1390
                  %s1393 = smul.u32 %s1392, 32
                  %s1394 = smul.u32 %s1392, 32
                  %s1395 = scalar_lea.vmem %s1299, %s1393 [#allocation5]
                  %s1396 = scalar_lea.vmem %s1310, %s1394
                $region79: #{tpu_custom_call.1} parent=73 // loop_footer
                  %s1376 = sadd.s32 %s1374, 1
                $region80: #{tpu_custom_call.1} parent=73 // loop_footer_branch
                  %1373 = sbr.rel target = $region76
                $region81: #{tpu_custom_call.1} parent=73 // loop_exit
                  _
                %s1397 = sshrl.u32 %s1306, 2
                %s1398 = sand.u32 %s1306, 3
                %s1399 = smul.u32 %s1397, 4
                %s1400 = smul.u32 8, %s1399
                %s1401 = scalar_lea.vmem %s1299, %s1400 [#allocation5]
                %s1402 = smul.u32 8, %s1399
                %s1403 = scalar_lea.vmem %s1310, %s1402
                // While loop
                $region82: #{tpu_custom_call.1} parent=73 // loop_pre_header
                  _
                $region83: #{tpu_custom_call.1} parent=73 // loop_header
                  %s1405 = sphi 0, %s1407
                  %p1406 = scmp.ge.s32.totalorder %s1405, %s1398
                  %s1410 = sphi 0, %s1417
                  %s1411 = sphi %s1401, %s1420
                  %s1412 = sphi %s1403, %s1421
                $region84: #{tpu_custom_call.1} parent=73 // loop_header_branch
                  %1409 = sbr.rel (%p1406) target = $region88
                $region85: #{tpu_custom_call.1} parent=73 // loop_body
                  %v1413 = vld [vmem:[%s1411] sm:$0xff]
                  %1414 = vst [vmem:[%s1412] sm:$0xff] %v1413
                  %s1415 = sadd.s32 1, %s1410
                  %p1416 = scmp.ge.s32.totalorder %s1415, %s1398
                  %s1417 = scalar_select %p1416, 0, %s1415
                  %s1418 = smul.u32 %s1417, 8
                  %s1419 = smul.u32 %s1417, 8
                  %s1420 = scalar_lea.vmem %s1401, %s1418 [#allocation5]
                  %s1421 = scalar_lea.vmem %s1403, %s1419
                $region86: #{tpu_custom_call.1} parent=73 // loop_footer
                  %s1407 = sadd.s32 %s1405, 1
                $region87: #{tpu_custom_call.1} parent=73 // loop_footer_branch
                  %1404 = sbr.rel target = $region83
                $region88: #{tpu_custom_call.1} parent=73 // loop_exit
                  _
              $region74: #{tpu_custom_call.1} parent=51 // pred_fallthru
                _
              // Predicated region
              $region89: #{tpu_custom_call.1} parent=51 // pred_check
                _
              $region90: #{tpu_custom_call.1} parent=51 // pred_check_branch
                %1423 = sbr.rel target = $region92
              $region91: #{tpu_custom_call.1} parent=51 // pred_region
                _
              $region92: #{tpu_custom_call.1} parent=51 // pred_fallthru
                _
            $region52: #{tpu_custom_call.1} parent=47 // pred_fallthru
              _
            // Predicated region
            $region53: #{tpu_custom_call.1} parent=47 // pred_check
              _
            $region54: #{tpu_custom_call.1} parent=47 // pred_check_branch
              %1317 = sbr.rel target = $region56
            $region55: #{tpu_custom_call.1} parent=47 // pred_region
              %s1319 = ssub.s32 256, 1
              %s1320 = sshrl.u32 %s1306, 2
              // While loop
              $region57: #{tpu_custom_call.1} parent=55 // loop_pre_header
                _
              $region58: #{tpu_custom_call.1} parent=55 // loop_header
                %s1322 = sphi 0, %s1324
                %p1323 = scmp.ge.s32.totalorder %s1322, %s1320
                %s1327 = sphi 0, %s1340
                %s1328 = sphi %s1299, %s1343
                %s1329 = sphi %s1310, %s1344
              $region59: #{tpu_custom_call.1} parent=55 // loop_header_branch
                %1326 = sbr.rel (%p1323) target = $region63
              $region60: #{tpu_custom_call.1} parent=55 // loop_body
                %v1330 = vld [vmem:[%s1328] sm:%s1319]
                %1331 = vst [vmem:[%s1329] sm:%s1319] %v1330
                %v1332 = vld [vmem:[%s1328 + $0x8] sm:%s1319]
                %1333 = vst [vmem:[%s1329 + $0x8] sm:%s1319] %v1332
                %v1334 = vld [vmem:[%s1328 + $0x10] sm:%s1319]
                %1335 = vst [vmem:[%s1329 + $0x10] sm:%s1319] %v1334
                %v1336 = vld [vmem:[%s1328 + $0x18] sm:%s1319]
                %1337 = vst [vmem:[%s1329 + $0x18] sm:%s1319] %v1336
                %s1338 = sadd.s32 1, %s1327
                %p1339 = scmp.ge.s32.totalorder %s1338, %s1320
                %s1340 = scalar_select %p1339, 0, %s1338
                %s1341 = smul.u32 %s1340, 32
                %s1342 = smul.u32 %s1340, 32
                %s1343 = scalar_lea.vmem %s1299, %s1341 [#allocation5]
                %s1344 = scalar_lea.vmem %s1310, %s1342
              $region61: #{tpu_custom_call.1} parent=55 // loop_footer
                %s1324 = sadd.s32 %s1322, 1
              $region62: #{tpu_custom_call.1} parent=55 // loop_footer_branch
                %1321 = sbr.rel target = $region58
              $region63: #{tpu_custom_call.1} parent=55 // loop_exit
                _
              %s1345 = sshrl.u32 %s1306, 2
              %s1346 = sand.u32 %s1306, 3
              %s1347 = smul.u32 %s1345, 4
              %s1348 = smul.u32 8, %s1347
              %s1349 = scalar_lea.vmem %s1299, %s1348 [#allocation5]
              %s1350 = smul.u32 8, %s1347
              %s1351 = scalar_lea.vmem %s1310, %s1350
              // While loop
              $region64: #{tpu_custom_call.1} parent=55 // loop_pre_header
                _
              $region65: #{tpu_custom_call.1} parent=55 // loop_header
                %s1353 = sphi 0, %s1355
                %p1354 = scmp.ge.s32.totalorder %s1353, %s1346
                %s1358 = sphi 0, %s1365
                %s1359 = sphi %s1349, %s1368
                %s1360 = sphi %s1351, %s1369
              $region66: #{tpu_custom_call.1} parent=55 // loop_header_branch
                %1357 = sbr.rel (%p1354) target = $region70
              $region67: #{tpu_custom_call.1} parent=55 // loop_body
                %v1361 = vld [vmem:[%s1359] sm:%s1319]
                %1362 = vst [vmem:[%s1360] sm:%s1319] %v1361
                %s1363 = sadd.s32 1, %s1358
                %p1364 = scmp.ge.s32.totalorder %s1363, %s1346
                %s1365 = scalar_select %p1364, 0, %s1363
                %s1366 = smul.u32 %s1365, 8
                %s1367 = smul.u32 %s1365, 8
                %s1368 = scalar_lea.vmem %s1349, %s1366 [#allocation5]
                %s1369 = scalar_lea.vmem %s1351, %s1367
              $region68: #{tpu_custom_call.1} parent=55 // loop_footer
                %s1355 = sadd.s32 %s1353, 1
              $region69: #{tpu_custom_call.1} parent=55 // loop_footer_branch
                %1352 = sbr.rel target = $region65
              $region70: #{tpu_custom_call.1} parent=55 // loop_exit
                _
            $region56: #{tpu_custom_call.1} parent=47 // pred_fallthru
              _
          $region48: #{tpu_custom_call.1} parent=43 // pred_fallthru
            _
          %1424 = vnop
        $region44: #{tpu_custom_call.1} parent=35 // pred_fallthru
          _
      $region36: #{tpu_custom_call.1} parent=5 // pred_fallthru
        _
      %p1425 = scmp.le.s32.totalorder 2, %s14
      // Predicated region
      $region93: #{tpu_custom_call.1} parent=5 // pred_check
        %p1426 = pneg %p1425
      $region94: #{tpu_custom_call.1} parent=5 // pred_check_branch
        %1428 = sbr.rel (%p1426) target = $region96
      $region95: #{tpu_custom_call.1} parent=5 // pred_region
        %s1429 = ssub.s32 %s14, 2
        // Predicated region
        $region97: #{tpu_custom_call.1} parent=95 // pred_check
          %p1430 = pneg %p142
        $region98: #{tpu_custom_call.1} parent=95 // pred_check_branch
          %1432 = sbr.rel (%p1430) target = $region100
        $region99: #{tpu_custom_call.1} parent=95 // pred_region
          %s1433 = sand.u32 %s127, 1
          %s1434 = sand.u32 %s127, 1
          %s1435 = smul.addr %s1434, 32
          %s1436 = scalar_lea.vmem [#allocation5], %s1435
        $region100: #{tpu_custom_call.1} parent=95 // pred_fallthru
          _
      $region96: #{tpu_custom_call.1} parent=5 // pred_fallthru
        _
    $region6: #{tpu_custom_call.1} parent=1 // loop_footer
      %s18 = sadd.s32 1, %s14
    $region7: #{tpu_custom_call.1} parent=1 // loop_footer_branch
      %13 = sbr.rel target = $region3
    $region8: #{tpu_custom_call.1} parent=1 // loop_exit
      _
    %1437 = vsyncpa [#allocation4], 1
    %s1438 = scalar_lea.sflag [#allocation4], 1
    %1439 = vsyncpa %s1438, 1

</llo_original>
